<compile_context>
chip_gen: v7x
topology: tpu7x:2x2x1
jax: 0.10.0
libtpu: 0.0.40
codegen_flags: <defaults>
</compile_context>

<pallas_src>
import functools

import jax
import jax.numpy as jnp
from jax import lax
from jax.experimental import pallas as pl
from jax.experimental.pallas import tpu as pltpu


# ----------------------------------------------------------------------------
# Fused PNL kernel (one grid point == one batch element, everything in VMEM)
# ----------------------------------------------------------------------------

def _pnl_fused_kernel(xh_ref, xl_ref, wgp_ref, bgp_ref, wth_ref, bth_ref,
                      ww_ref, bw_ref, o_ref, y_scr,
                      *, c_red, n_h, n_l, r, inv_nl):
    f32, bf16 = jnp.float32, jnp.bfloat16

    xh_f32 = xh_ref[0]                      # (Ch, Sh) f32 -- kept for residual
    xh = xh_f32.astype(bf16)                # in-kernel cast (no extra XLA pass)
    xl = xl_ref[0].astype(bf16)             # (Cl, Sl)

    # --- g & phi 1x1 convs in ONE MXU pass (weights stacked along Cout) -----
    gphi = (jnp.dot(wgp_ref[...], xl, preferred_element_type=f32)
            + bgp_ref[...]).astype(bf16)    # (2*c_red, Sl)

    # --- theta 1x1 conv; one small f32 transpose (XLU) so every attention
    #     contraction below is a plain NN / NT matmul ------------------------
    th_f32 = (jnp.dot(wth_ref[...], xh, preferred_element_type=f32)
              + bth_ref[...])               # (c_red, Sh)
    thT = th_f32.T.astype(bf16)             # (Sh, c_red)

    # --- energy = theta_x @ phi_x.  The module's view(B, low_dim, -1) +
    #     permutes reduce, in channel-major layout, to tile-aligned lane
    #     slices of width N = S // reduc_ratio. ------------------------------
    energy = None                           # (Nh, Nl) f32
    for e in range(r):
        thT_e = thT[e * n_h:(e + 1) * n_h, :]          # (Nh, c_red)
        ph_e = gphi[c_red:, e * n_l:(e + 1) * n_l]     # (c_red, Nl)
        part = jnp.dot(thT_e, ph_e, preferred_element_type=f32)
        energy = part if energy is None else energy + part
    # Scale in f32 *before* the bf16 cast (matches reference rounding).
    att = (energy * inv_nl).astype(bf16)               # (Nh, Nl)

    # --- y back in channel-major layout:
    #     y_cm[:, e*Nh:(e+1)*Nh] = g_e @ att^T   (trans_b contraction) -------
    for e in range(r):
        g_e = gphi[:c_red, e * n_l:(e + 1) * n_l]      # (c_red, Nl)
        y_scr[:, e * n_h:(e + 1) * n_h] = lax.dot_general(
            g_e, att, (((1,), (1,)), ((), ())),
            preferred_element_type=f32).astype(bf16)

    # --- W conv (eval-mode BN folded into weight/bias) + residual, f32 ------
    z = (jnp.dot(ww_ref[...], y_scr[...], preferred_element_type=f32)
         + bw_ref[...] + xh_f32)
    o_ref[0] = z.astype(o_ref.dtype)


# ----------------------------------------------------------------------------
# Wrapper
# ----------------------------------------------------------------------------

def pnl_forward(x_h, x_l, kparams):
    B, Ch, Hh, Wh = x_h.shape
    _, Cl, Hl, Wl = x_l.shape
    w_theta = kparams["w_theta"]            # (c_red, Ch) bf16
    w_W = kparams["w_W"]                    # (high_dim, c_red) bf16
    c_red = w_theta.shape[0]
    high_dim = w_W.shape[0]
    r = Cl // c_red                         # = reduc_ratio (low_dim == Cl)
    Sh, Sl = Hh * Wh, Hl * Wl
    n_h, n_l = Sh // r, Sl // r

    assert Cl == r * c_red and Sh % r == 0 and Sl % r == 0
    # TODO(synk): pad/mask path for N not a multiple of 128 (lane tile).
    assert n_h % 128 == 0 and n_l % 128 == 0, (n_h, n_l)

    # NCHW is already channel-major; flattening spatial is a free reshape.
    xh_cm = x_h.reshape(B, Ch, Sh)
    xl_cm = x_l.reshape(B, Cl, Sl)

    kernel = functools.partial(
        _pnl_fused_kernel, c_red=c_red, n_h=n_h, n_l=n_l, r=r,
        inv_nl=float(1.0 / n_l))

    z_cm = pl.pallas_call(
        kernel,
        out_shape=jax.ShapeDtypeStruct((B, high_dim, Sh), jnp.float32),
        grid=(B,),
        in_specs=[
            pl.BlockSpec((1, Ch, Sh), lambda b: (b, 0, 0)),        # x_h
            pl.BlockSpec((1, Cl, Sl), lambda b: (b, 0, 0)),        # x_l
            pl.BlockSpec((2 * c_red, Cl), lambda b: (0, 0)),       # W_g | W_phi
            pl.BlockSpec((2 * c_red, 1), lambda b: (0, 0)),        # b_g | b_phi
            pl.BlockSpec((c_red, Ch), lambda b: (0, 0)),           # W_theta
            pl.BlockSpec((c_red, 1), lambda b: (0, 0)),            # b_theta
            pl.BlockSpec((high_dim, c_red), lambda b: (0, 0)),     # W_W (BN folded)
            pl.BlockSpec((high_dim, 1), lambda b: (0, 0)),         # b_W (BN folded)
        ],
        out_specs=pl.BlockSpec((1, high_dim, Sh), lambda b: (b, 0, 0)),
        scratch_shapes=[pltpu.VMEM((c_red, Sh), jnp.bfloat16)],    # y (channel-major)
        compiler_params=pltpu.CompilerParams(
            dimension_semantics=("parallel",)),
    )(xh_cm, xl_cm, kparams["w_gphi"], kparams["b_gphi"],
      kparams["w_theta"], kparams["b_theta"], kparams["w_W"], kparams["b_W"])

    return z_cm.reshape(B, high_dim, Hh, Wh)


# ----------------------------------------------------------------------------
# Pure-JAX reference (mirrors the PyTorch module's view/permute/matmul
# sequence; same bf16 rounding points as the kernel) for self-validation.
# ----------------------------------------------------------------------------

def pnl_reference(x_h, x_l, params):
    B, Ch, Hh, Wh = x_h.shape
    _, Cl, Hl, Wl = x_l.shape
    c_red, low_dim = params["w_g"].shape
    high_dim = params["w_W"].shape[0]
    Sh, Sl = Hh * Wh, Hl * Wl

    def conv(x_cm, w, b):
        return (jnp.einsum("oc,bcs->bos", w.astype(jnp.float32),
                           x_cm.astype(jnp.float32), precision="highest")
                + b[None, :, None])

    xh_bf = x_h.reshape(B, Ch, Sh).astype(jnp.bfloat16)
    xl_bf = x_l.reshape(B, Cl, Sl).astype(jnp.bfloat16)

    g_cm = conv(xl_bf, params["w_g"], params["b_g"]).astype(jnp.bfloat16)
    th_cm = conv(xh_bf, params["w_theta"], params["b_theta"]).astype(jnp.bfloat16)
    ph_cm = conv(xl_bf, params["w_phi"], params["b_phi"]).astype(jnp.bfloat16)

    Nh = c_red * Sh // low_dim
    Nl = c_red * Sl // low_dim
    theta_x = jnp.swapaxes(th_cm.reshape(B, low_dim, Nh), 1, 2).astype(jnp.float32)
    phi_x = ph_cm.reshape(B, low_dim, Nl).astype(jnp.float32)
    g_x = jnp.swapaxes(g_cm.reshape(B, low_dim, Nl), 1, 2).astype(jnp.float32)

    energy = jnp.einsum("bnd,bdm->bnm", theta_x, phi_x, precision="highest")
    attention = (energy / Nl).astype(jnp.bfloat16).astype(jnp.float32)
    y = jnp.einsum("bnm,bmd->bnd", attention, g_x,
                   precision="highest").astype(jnp.bfloat16)
    y_cm = jnp.swapaxes(y, 1, 2).reshape(B, c_red, Sh)

    w_y = conv(y_cm, params["w_W"], params["b_W"])
    z = w_y + x_h.reshape(B, high_dim, Sh)
    return z.reshape(B, high_dim, Hh, Wh)


# ----------------------------------------------------------------------------
# Deterministic synthetic parameters (eval-mode BN folded into the W conv)
# ----------------------------------------------------------------------------

def build_params(key, high_dim, low_dim, reduc_ratio=2):
    c_red = low_dim // reduc_ratio
    ks = jax.random.split(key, 12)

    def conv_init(kw, kb, cout, cin):
        bound = 1.0 / float(cin) ** 0.5
        w = jax.random.uniform(kw, (cout, cin), jnp.float32, -bound, bound)
        b = jax.random.uniform(kb, (cout,), jnp.float32, -bound, bound)
        return w, b

    w_g, b_g = conv_init(ks[0], ks[1], c_red, low_dim)
    w_th, b_th = conv_init(ks[2], ks[3], c_red, high_dim)
    w_ph, b_ph = conv_init(ks[4], ks[5], c_red, low_dim)
    w_w, b_w = conv_init(ks[6], ks[7], high_dim, c_red)

    # Eval-mode BatchNorm2d(high_dim) with synthetic nonzero stats, folded
    # into the W conv weight/bias.
    gamma = 1.0 + 0.1 * jax.random.normal(ks[8], (high_dim,), jnp.float32)
    beta = 0.1 * jax.random.normal(ks[9], (high_dim,), jnp.float32)
    mean = 0.1 * jax.random.normal(ks[10], (high_dim,), jnp.float32)
    var = 1.0 + 0.1 * jnp.abs(jax.random.normal(ks[11], (high_dim,), jnp.float32))
    scale = gamma * jax.lax.rsqrt(var + 1e-5)
    w_w_fold = w_w * scale[:, None]
    b_w_fold = b_w * scale + beta - mean * scale

    return {
        "w_g": w_g.astype(jnp.bfloat16), "b_g": b_g,
        "w_theta": w_th.astype(jnp.bfloat16), "b_theta": b_th,
        "w_phi": w_ph.astype(jnp.bfloat16), "b_phi": b_ph,
        "w_W": w_w_fold.astype(jnp.bfloat16), "b_W": b_w_fold,
    }


def pack_kernel_params(params):
    """Kernel-ready params: g/phi weights stacked along Cout, column biases."""
    return {
        "w_gphi": jnp.concatenate([params["w_g"], params["w_phi"]], axis=0),
        "b_gphi": jnp.concatenate([params["b_g"], params["b_phi"]],
                                  axis=0).reshape(-1, 1),
        "w_theta": params["w_theta"],
        "b_theta": params["b_theta"].reshape(-1, 1),
        "w_W": params["w_W"],
        "b_W": params["b_W"].reshape(-1, 1),
    }


# ----------------------------------------------------------------------------
# Main
# ----------------------------------------------------------------------------

if __name__ == "__main__":
    root = jax.random.PRNGKey(0)
    kp, kh, kl = jax.random.split(root, 3)

    high_dim, low_dim, reduc_ratio = 256, 256, 2
    B, H, W = 2, 16, 16

    params = build_params(kp, high_dim, low_dim, reduc_ratio)
    kparams = pack_kernel_params(params)
    x_h = jax.random.normal(kh, (B, high_dim, H, W), jnp.float32)
    x_l = jax.random.normal(kl, (B, low_dim, H, W), jnp.float32)

    fwd = jax.jit(pnl_forward)
    z = jax.block_until_ready(fwd(x_h, x_l, kparams))

    assert z.shape == (B, high_dim, H, W), z.shape
    assert bool(jnp.all(jnp.isfinite(z)))

    z_ref = pnl_reference(x_h, x_l, params)
    max_err = float(jnp.max(jnp.abs(z - z_ref)))
    assert max_err < 5e-2, max_err

    print("KERNEL_OK")
</pallas_src>

<mosaic_0001>
module attributes {stable_mosaic.version = 11 : i64} {
  func.func @_pnl_fused_kernel(%arg0: i32, %arg1: memref<1x256x256xf32, #tpu.memory_space<vmem>>, %arg2: memref<1x256x256xf32, #tpu.memory_space<vmem>>, %arg3: memref<256x256xbf16, #tpu.memory_space<vmem>>, %arg4: memref<256x1xf32, #tpu.memory_space<vmem>>, %arg5: memref<128x256xbf16, #tpu.memory_space<vmem>>, %arg6: memref<128x1xf32, #tpu.memory_space<vmem>>, %arg7: memref<256x128xbf16, #tpu.memory_space<vmem>>, %arg8: memref<256x1xf32, #tpu.memory_space<vmem>>, %arg9: memref<1x256x256xf32, #tpu.memory_space<vmem>>, %arg10: memref<128x256xbf16, #tpu.memory_space<vmem>>) attributes {dimension_semantics = [#tpu.dimension_semantics<parallel>], iteration_bounds = array<i64: 2>, scalar_prefetch = 0 : i64, scratch_operands = 1 : i64, tpu.core_type = #tpu.core_type<tc>, window_params = [{transform_indices = @transform_0, window_bounds = array<i64: 1, 256, 256>}, {transform_indices = @transform_1, window_bounds = array<i64: 1, 256, 256>}, {pipeline_mode = #tpu.pipeline_mode<synchronous>, transform_indices = @transform_2, window_bounds = array<i64: 256, 256>}, {pipeline_mode = #tpu.pipeline_mode<synchronous>, transform_indices = @transform_3, window_bounds = array<i64: 256, 1>}, {pipeline_mode = #tpu.pipeline_mode<synchronous>, transform_indices = @transform_4, window_bounds = array<i64: 128, 256>}, {pipeline_mode = #tpu.pipeline_mode<synchronous>, transform_indices = @transform_5, window_bounds = array<i64: 128, 1>}, {pipeline_mode = #tpu.pipeline_mode<synchronous>, transform_indices = @transform_6, window_bounds = array<i64: 256, 128>}, {pipeline_mode = #tpu.pipeline_mode<synchronous>, transform_indices = @transform_7, window_bounds = array<i64: 256, 1>}, {transform_indices = @transform_8, window_bounds = array<i64: 1, 256, 256>}]} {
    %c0 = arith.constant 0 : index
    %c0_0 = arith.constant 0 : index
    %c0_1 = arith.constant 0 : index
    %0 = vector.load %arg1[%c0, %c0_0, %c0_1] : memref<1x256x256xf32, #tpu.memory_space<vmem>>, vector<1x256x256xf32>
    %1 = vector.shape_cast %0 : vector<1x256x256xf32> to vector<256x256xf32>
    %2 = arith.truncf %1 : vector<256x256xf32> to vector<256x256xbf16>
    %c0_2 = arith.constant 0 : index
    %c0_3 = arith.constant 0 : index
    %c0_4 = arith.constant 0 : index
    %3 = vector.load %arg2[%c0_2, %c0_3, %c0_4] : memref<1x256x256xf32, #tpu.memory_space<vmem>>, vector<1x256x256xf32>
    %4 = vector.shape_cast %3 : vector<1x256x256xf32> to vector<256x256xf32>
    %5 = arith.truncf %4 : vector<256x256xf32> to vector<256x256xbf16>
    %c0_5 = arith.constant 0 : index
    %c0_6 = arith.constant 0 : index
    %6 = vector.load %arg3[%c0_5, %c0_6] : memref<256x256xbf16, #tpu.memory_space<vmem>>, vector<256x256xbf16>
    %cst = arith.constant dense<0.000000e+00> : vector<256x256xf32>
    %7 = tpu.matmul %6, %5, %cst {dimension_numbers = #tpu.dot_dimension_numbers<[1], [0], [0], [1], [0, 0, 1, 1], [], []>} : vector<256x256xbf16>, vector<256x256xbf16>, vector<256x256xf32> -> vector<256x256xf32>
    %c0_7 = arith.constant 0 : index
    %c0_8 = arith.constant 0 : index
    %8 = vector.load %arg4[%c0_7, %c0_8] : memref<256x1xf32, #tpu.memory_space<vmem>>, vector<256x1xf32>
    %9 = vector.broadcast %8 : vector<256x1xf32> to vector<256x256xf32>
    %10 = arith.addf %7, %9 : vector<256x256xf32>
    %11 = arith.truncf %10 : vector<256x256xf32> to vector<256x256xbf16>
    %c0_9 = arith.constant 0 : index
    %c0_10 = arith.constant 0 : index
    %12 = vector.load %arg5[%c0_9, %c0_10] : memref<128x256xbf16, #tpu.memory_space<vmem>>, vector<128x256xbf16>
    %cst_11 = arith.constant dense<0.000000e+00> : vector<128x256xf32>
    %13 = tpu.matmul %12, %2, %cst_11 {dimension_numbers = #tpu.dot_dimension_numbers<[1], [0], [0], [1], [0, 0, 1, 1], [], []>} : vector<128x256xbf16>, vector<256x256xbf16>, vector<128x256xf32> -> vector<128x256xf32>
    %c0_12 = arith.constant 0 : index
    %c0_13 = arith.constant 0 : index
    %14 = vector.load %arg6[%c0_12, %c0_13] : memref<128x1xf32, #tpu.memory_space<vmem>>, vector<128x1xf32>
    %15 = vector.broadcast %14 : vector<128x1xf32> to vector<128x256xf32>
    %16 = arith.addf %13, %15 : vector<128x256xf32>
    %17 = tpu.transpose %16, [1, 0] : vector<128x256xf32> -> vector<256x128xf32>
    %18 = arith.truncf %17 : vector<256x128xf32> to vector<256x128xbf16>
    %19 = vector.extract_strided_slice %18 {offsets = [0, 0], sizes = [128, 128], strides = [1, 1]} : vector<256x128xbf16> to vector<128x128xbf16>
    %20 = vector.extract_strided_slice %11 {offsets = [128, 0], sizes = [128, 128], strides = [1, 1]} : vector<256x256xbf16> to vector<128x128xbf16>
    %cst_14 = arith.constant dense<0.000000e+00> : vector<128x128xf32>
    %21 = tpu.matmul %19, %20, %cst_14 {dimension_numbers = #tpu.dot_dimension_numbers<[1], [0], [0], [1], [0, 0, 1, 1], [], []>} : vector<128x128xbf16>, vector<128x128xbf16>, vector<128x128xf32> -> vector<128x128xf32>
    %22 = vector.extract_strided_slice %18 {offsets = [128, 0], sizes = [128, 128], strides = [1, 1]} : vector<256x128xbf16> to vector<128x128xbf16>
    %23 = vector.extract_strided_slice %11 {offsets = [128, 128], sizes = [128, 128], strides = [1, 1]} : vector<256x256xbf16> to vector<128x128xbf16>
    %cst_15 = arith.constant dense<0.000000e+00> : vector<128x128xf32>
    %24 = tpu.matmul %22, %23, %cst_15 {dimension_numbers = #tpu.dot_dimension_numbers<[1], [0], [0], [1], [0, 0, 1, 1], [], []>} : vector<128x128xbf16>, vector<128x128xbf16>, vector<128x128xf32> -> vector<128x128xf32>
    %25 = arith.addf %21, %24 : vector<128x128xf32>
    %cst_16 = arith.constant 7.812500e-03 : f32
    %26 = vector.broadcast %cst_16 : f32 to vector<128x128xf32>
    %27 = arith.mulf %25, %26 : vector<128x128xf32>
    %28 = arith.truncf %27 : vector<128x128xf32> to vector<128x128xbf16>
    %29 = vector.extract_strided_slice %11 {offsets = [0, 0], sizes = [128, 128], strides = [1, 1]} : vector<256x256xbf16> to vector<128x128xbf16>
    %cst_17 = arith.constant dense<0.000000e+00> : vector<128x128xf32>
    %30 = tpu.matmul %29, %28, %cst_17 {dimension_numbers = #tpu.dot_dimension_numbers<[1], [1], [0], [0], [0, 0, 1, 0], [], []>} : vector<128x128xbf16>, vector<128x128xbf16>, vector<128x128xf32> -> vector<128x128xf32>
    %31 = arith.truncf %30 : vector<128x128xf32> to vector<128x128xbf16>
    %c0_18 = arith.constant 0 : index
    %c0_19 = arith.constant 0 : index
    %32 = vector.load %arg10[%c0_18, %c0_19] : memref<128x256xbf16, #tpu.memory_space<vmem>>, vector<128x128xbf16>
    tpu.vector_store %arg10[%c0_18, %c0_19], %31 {strides = array<i32>} : memref<128x256xbf16, #tpu.memory_space<vmem>>, vector<128x128xbf16>,
    %33 = vector.extract_strided_slice %11 {offsets = [0, 128], sizes = [128, 128], strides = [1, 1]} : vector<256x256xbf16> to vector<128x128xbf16>
    %cst_20 = arith.constant dense<0.000000e+00> : vector<128x128xf32>
    %34 = tpu.matmul %33, %28, %cst_20 {dimension_numbers = #tpu.dot_dimension_numbers<[1], [1], [0], [0], [0, 0, 1, 0], [], []>} : vector<128x128xbf16>, vector<128x128xbf16>, vector<128x128xf32> -> vector<128x128xf32>
    %35 = arith.truncf %34 : vector<128x128xf32> to vector<128x128xbf16>
    %c0_21 = arith.constant 0 : index
    %c128 = arith.constant 128 : index
    %36 = vector.load %arg10[%c0_21, %c128] : memref<128x256xbf16, #tpu.memory_space<vmem>>, vector<128x128xbf16>
    tpu.vector_store %arg10[%c0_21, %c128], %35 {strides = array<i32>} : memref<128x256xbf16, #tpu.memory_space<vmem>>, vector<128x128xbf16>,
    %c0_22 = arith.constant 0 : index
    %c0_23 = arith.constant 0 : index
    %37 = vector.load %arg7[%c0_22, %c0_23] : memref<256x128xbf16, #tpu.memory_space<vmem>>, vector<256x128xbf16>
    %c0_24 = arith.constant 0 : index
    %c0_25 = arith.constant 0 : index
    %38 = vector.load %arg10[%c0_24, %c0_25] : memref<128x256xbf16, #tpu.memory_space<vmem>>, vector<128x256xbf16>
    %cst_26 = arith.constant dense<0.000000e+00> : vector<256x256xf32>
    %39 = tpu.matmul %37, %38, %cst_26 {dimension_numbers = #tpu.dot_dimension_numbers<[1], [0], [0], [1], [0, 0, 1, 1], [], []>} : vector<256x128xbf16>, vector<128x256xbf16>, vector<256x256xf32> -> vector<256x256xf32>
    %c0_27 = arith.constant 0 : index
    %c0_28 = arith.constant 0 : index
    %40 = vector.load %arg8[%c0_27, %c0_28] : memref<256x1xf32, #tpu.memory_space<vmem>>, vector<256x1xf32>
    %41 = vector.broadcast %40 : vector<256x1xf32> to vector<256x256xf32>
    %42 = arith.addf %39, %41 : vector<256x256xf32>
    %43 = arith.addf %42, %1 : vector<256x256xf32>
    %c0_29 = arith.constant 0 : index
    %c0_30 = arith.constant 0 : index
    %c0_31 = arith.constant 0 : index
    %44 = vector.load %arg9[%c0_29, %c0_30, %c0_31] : memref<1x256x256xf32, #tpu.memory_space<vmem>>, vector<1x256x256xf32>
    %45 = vector.shape_cast %44 : vector<1x256x256xf32> to vector<256x256xf32>
    %46 = vector.shape_cast %43 : vector<256x256xf32> to vector<1x256x256xf32>
    tpu.vector_store %arg9[%c0_29, %c0_30, %c0_31], %46 {strides = array<i32>} : memref<1x256x256xf32, #tpu.memory_space<vmem>>, vector<1x256x256xf32>,
    return
  }
  func.func @transform_0(%arg0: i32) -> (i32, i32, i32) {
    %c0_i32 = arith.constant 0 : i32
    %c0_i32_0 = arith.constant 0 : i32
    %c0_i32_1 = arith.constant 0 : i32
    return %arg0, %c0_i32, %c0_i32_0 : i32, i32, i32
  }
  func.func @transform_1(%arg0: i32) -> (i32, i32, i32) {
    %c0_i32 = arith.constant 0 : i32
    %c0_i32_0 = arith.constant 0 : i32
    %c0_i32_1 = arith.constant 0 : i32
    return %arg0, %c0_i32, %c0_i32_0 : i32, i32, i32
  }
  func.func @transform_2(%arg0: i32) -> (i32, i32) {
    %c0_i32 = arith.constant 0 : i32
    %c0_i32_0 = arith.constant 0 : i32
    %c0_i32_1 = arith.constant 0 : i32
    return %c0_i32, %c0_i32_0 : i32, i32
  }
  func.func @transform_3(%arg0: i32) -> (i32, i32) {
    %c0_i32 = arith.constant 0 : i32
    %c0_i32_0 = arith.constant 0 : i32
    %c0_i32_1 = arith.constant 0 : i32
    return %c0_i32, %c0_i32_0 : i32, i32
  }
  func.func @transform_4(%arg0: i32) -> (i32, i32) {
    %c0_i32 = arith.constant 0 : i32
    %c0_i32_0 = arith.constant 0 : i32
    %c0_i32_1 = arith.constant 0 : i32
    return %c0_i32, %c0_i32_0 : i32, i32
  }
  func.func @transform_5(%arg0: i32) -> (i32, i32) {
    %c0_i32 = arith.constant 0 : i32
    %c0_i32_0 = arith.constant 0 : i32
    %c0_i32_1 = arith.constant 0 : i32
    return %c0_i32, %c0_i32_0 : i32, i32
  }
  func.func @transform_6(%arg0: i32) -> (i32, i32) {
    %c0_i32 = arith.constant 0 : i32
    %c0_i32_0 = arith.constant 0 : i32
    %c0_i32_1 = arith.constant 0 : i32
    return %c0_i32, %c0_i32_0 : i32, i32
  }
  func.func @transform_7(%arg0: i32) -> (i32, i32) {
    %c0_i32 = arith.constant 0 : i32
    %c0_i32_0 = arith.constant 0 : i32
    %c0_i32_1 = arith.constant 0 : i32
    return %c0_i32, %c0_i32_0 : i32, i32
  }
  func.func @transform_8(%arg0: i32) -> (i32, i32, i32) {
    %c0_i32 = arith.constant 0 : i32
    %c0_i32_0 = arith.constant 0 : i32
    %c0_i32_1 = arith.constant 0 : i32
    return %arg0, %c0_i32, %c0_i32_0 : i32, i32, i32
  }
}

</mosaic_0001>

<llo_original>
// kernel: pnl_forward.1
$region0: #{pnl_forward.1}
  #allocation0 [shape = 'u32[]', space=smem, size = 0x4, offset = 0x4, fixed_abs, tag = 'smem constant byte address 0x4 - core index']
  #allocation1 [shape = 'u32[144,128]{1,0:T(1,128)}', space=vmem, size = 0x12000, scoped, tag = 'internal scratch']
  #allocation2 [shape = 'bf16[128,256]{1,0:T(16,128)(2,1)}', space=vmem, size = 0x10000, scoped, tag = 'scratch operand']
  %s0 = inlined_call_operand.vmem [shape: f32[2,256,256], index: 0, kind: input, shape index: {}]
  %s1 = inlined_call_operand.vmem [shape: f32[2,256,256], index: 1, kind: input, shape index: {}]
  %s2 = inlined_call_operand.vmem [shape: bf16[256,256], index: 2, kind: input, shape index: {}]
  %s3 = inlined_call_operand.vmem [shape: f32[256,1], index: 3, kind: input, shape index: {}]
  %s4 = inlined_call_operand.vmem [shape: bf16[128,256], index: 4, kind: input, shape index: {}]
  %s5 = inlined_call_operand.vmem [shape: f32[128,1], index: 5, kind: input, shape index: {}]
  %s6 = inlined_call_operand.vmem [shape: bf16[256,128], index: 6, kind: input, shape index: {}]
  %s7 = inlined_call_operand.vmem [shape: f32[256,1], index: 7, kind: input, shape index: {}]
  %s8 = inlined_call_operand.vmem [shape: f32[2,256,256], index: 8, kind: output, shape index: {}]
  %s9 = sld [smem:[#allocation0]]
  $region65: #{pnl_forward.1} parent=0
    _
  %s11 = ssub.s32 1, %s9
  %s12 = scalar_select 0, %s11, %s9
  loop: start=0, step=1, limit=4
  $region2: #{pnl_forward.1} parent=0 // loop_pre_header
    _
  $region3: #{pnl_forward.1} parent=0 // loop_header
    %s14 = sphi 0, %s18
    %p15 = scmp.ge.s32.totalorder %s14, 4
    %s24 = sphi 0, %s26
    %s27 = sphi 0, %s24
    %s28 = sphi 0, %s27
    %s44 = sphi 0, %s28
    %s50 = sphi 0, %s52
    %s53 = sphi 0, %s50
    %s54 = sphi 0, %s53
    %s70 = sphi 0, %s54
    %s74 = sphi 0, %s74
    %s76 = sphi 0, %s74
    %s77 = sphi 0, %s76
    %s91 = sphi 0, %s77
    %s95 = sphi 0, %s95
    %s97 = sphi 0, %s95
    %s98 = sphi 0, %s97
    %s112 = sphi 0, %s98
    %s116 = sphi 0, %s116
    %s118 = sphi 0, %s116
    %s119 = sphi 0, %s118
    %s133 = sphi 0, %s119
    %s137 = sphi 0, %s137
    %s139 = sphi 0, %s137
    %s140 = sphi 0, %s139
    %s154 = sphi 0, %s140
    %s158 = sphi 0, %s158
    %s160 = sphi 0, %s158
    %s161 = sphi 0, %s160
    %s175 = sphi 0, %s161
    %s179 = sphi 0, %s179
    %s181 = sphi 0, %s179
    %s182 = sphi 0, %s181
    %s196 = sphi 0, %s182
    %s202 = sphi 0, %s204
    %s205 = sphi 0, %s202
    %s206 = sphi 0, %s205
    %s222 = sphi 0, %s206
  $region4: #{pnl_forward.1} parent=0 // loop_header_branch
    %17 = sbr.rel (%p15) target = $region8
  $region5: #{pnl_forward.1} parent=0 // loop_body
    %s19 = ssub.s32 %s14, 1
    %s20 = ssub.s32 %s14, 2
    %s21 = sadd.s32 %s14, 1
    %s22 = ssub.s32 %s14, %s21
    %p23 = scmp.eq.s32.totalorder %s22, 0
    %s25 = sadd.s32 %s24, 1
    %s26 = scalar_select %p23, %s24, %s25
    %p29 = pneg %p23
    %p30 = scmp.eq.s32.totalorder %s14, 1
    %p31 = por %p29, %p30
    %p32 = scmp.ne.s32.totalorder %s24, %s27
    %p33 = scmp.eq.s32.totalorder %s14, 0
    %p34 = por %p32, %p33
    %p35 = scmp.ne.s32.totalorder %s24, %s27
    %p36 = scmp.eq.s32.totalorder %s19, 1
    %p37 = por %p35, %p36
    %p38 = scmp.ne.s32.totalorder %s27, %s28
    %p39 = scmp.eq.s32.totalorder %s19, 0
    %p40 = por %p38, %p39
    %p41 = scmp.ne.s32.totalorder %s27, %s28
    %p42 = scmp.eq.s32.totalorder %s20, 1
    %p43 = por %p41, %p42
    %p45 = scmp.ne.s32.totalorder %s28, %s44
    %p46 = scmp.eq.s32.totalorder %s20, 0
    %p47 = por %p45, %p46
    %s48 = ssub.s32 %s14, %s21
    %p49 = scmp.eq.s32.totalorder %s48, 0
    %s51 = sadd.s32 %s50, 1
    %s52 = scalar_select %p49, %s50, %s51
    %p55 = pneg %p49
    %p56 = scmp.eq.s32.totalorder %s14, 1
    %p57 = por %p55, %p56
    %p58 = scmp.ne.s32.totalorder %s50, %s53
    %p59 = scmp.eq.s32.totalorder %s14, 0
    %p60 = por %p58, %p59
    %p61 = scmp.ne.s32.totalorder %s50, %s53
    %p62 = scmp.eq.s32.totalorder %s19, 1
    %p63 = por %p61, %p62
    %p64 = scmp.ne.s32.totalorder %s53, %s54
    %p65 = scmp.eq.s32.totalorder %s19, 0
    %p66 = por %p64, %p65
    %p67 = scmp.ne.s32.totalorder %s53, %s54
    %p68 = scmp.eq.s32.totalorder %s20, 1
    %p69 = por %p67, %p68
    %p71 = scmp.ne.s32.totalorder %s54, %s70
    %p72 = scmp.eq.s32.totalorder %s20, 0
    %p73 = por %p71, %p72
    %s75 = sadd.s32 %s74, 1
    %p78 = scmp.eq.s32.totalorder %s14, 1
    %p79 = scmp.ne.s32.totalorder %s74, %s76
    %p80 = scmp.eq.s32.totalorder %s14, 0
    %p81 = por %p79, %p80
    %p82 = scmp.ne.s32.totalorder %s74, %s76
    %p83 = scmp.eq.s32.totalorder %s19, 1
    %p84 = por %p82, %p83
    %p85 = scmp.ne.s32.totalorder %s76, %s77
    %p86 = scmp.eq.s32.totalorder %s19, 0
    %p87 = por %p85, %p86
    %p88 = scmp.ne.s32.totalorder %s76, %s77
    %p89 = scmp.eq.s32.totalorder %s20, 1
    %p90 = por %p88, %p89
    %p92 = scmp.ne.s32.totalorder %s77, %s91
    %p93 = scmp.eq.s32.totalorder %s20, 0
    %p94 = por %p92, %p93
    %s96 = sadd.s32 %s95, 1
    %p99 = scmp.eq.s32.totalorder %s14, 1
    %p100 = scmp.ne.s32.totalorder %s95, %s97
    %p101 = scmp.eq.s32.totalorder %s14, 0
    %p102 = por %p100, %p101
    %p103 = scmp.ne.s32.totalorder %s95, %s97
    %p104 = scmp.eq.s32.totalorder %s19, 1
    %p105 = por %p103, %p104
    %p106 = scmp.ne.s32.totalorder %s97, %s98
    %p107 = scmp.eq.s32.totalorder %s19, 0
    %p108 = por %p106, %p107
    %p109 = scmp.ne.s32.totalorder %s97, %s98
    %p110 = scmp.eq.s32.totalorder %s20, 1
    %p111 = por %p109, %p110
    %p113 = scmp.ne.s32.totalorder %s98, %s112
    %p114 = scmp.eq.s32.totalorder %s20, 0
    %p115 = por %p113, %p114
    %s117 = sadd.s32 %s116, 1
    %p120 = scmp.eq.s32.totalorder %s14, 1
    %p121 = scmp.ne.s32.totalorder %s116, %s118
    %p122 = scmp.eq.s32.totalorder %s14, 0
    %p123 = por %p121, %p122
    %p124 = scmp.ne.s32.totalorder %s116, %s118
    %p125 = scmp.eq.s32.totalorder %s19, 1
    %p126 = por %p124, %p125
    %p127 = scmp.ne.s32.totalorder %s118, %s119
    %p128 = scmp.eq.s32.totalorder %s19, 0
    %p129 = por %p127, %p128
    %p130 = scmp.ne.s32.totalorder %s118, %s119
    %p131 = scmp.eq.s32.totalorder %s20, 1
    %p132 = por %p130, %p131
    %p134 = scmp.ne.s32.totalorder %s119, %s133
    %p135 = scmp.eq.s32.totalorder %s20, 0
    %p136 = por %p134, %p135
    %s138 = sadd.s32 %s137, 1
    %p141 = scmp.eq.s32.totalorder %s14, 1
    %p142 = scmp.ne.s32.totalorder %s137, %s139
    %p143 = scmp.eq.s32.totalorder %s14, 0
    %p144 = por %p142, %p143
    %p145 = scmp.ne.s32.totalorder %s137, %s139
    %p146 = scmp.eq.s32.totalorder %s19, 1
    %p147 = por %p145, %p146
    %p148 = scmp.ne.s32.totalorder %s139, %s140
    %p149 = scmp.eq.s32.totalorder %s19, 0
    %p150 = por %p148, %p149
    %p151 = scmp.ne.s32.totalorder %s139, %s140
    %p152 = scmp.eq.s32.totalorder %s20, 1
    %p153 = por %p151, %p152
    %p155 = scmp.ne.s32.totalorder %s140, %s154
    %p156 = scmp.eq.s32.totalorder %s20, 0
    %p157 = por %p155, %p156
    %s159 = sadd.s32 %s158, 1
    %p162 = scmp.eq.s32.totalorder %s14, 1
    %p163 = scmp.ne.s32.totalorder %s158, %s160
    %p164 = scmp.eq.s32.totalorder %s14, 0
    %p165 = por %p163, %p164
    %p166 = scmp.ne.s32.totalorder %s158, %s160
    %p167 = scmp.eq.s32.totalorder %s19, 1
    %p168 = por %p166, %p167
    %p169 = scmp.ne.s32.totalorder %s160, %s161
    %p170 = scmp.eq.s32.totalorder %s19, 0
    %p171 = por %p169, %p170
    %p172 = scmp.ne.s32.totalorder %s160, %s161
    %p173 = scmp.eq.s32.totalorder %s20, 1
    %p174 = por %p172, %p173
    %p176 = scmp.ne.s32.totalorder %s161, %s175
    %p177 = scmp.eq.s32.totalorder %s20, 0
    %p178 = por %p176, %p177
    %s180 = sadd.s32 %s179, 1
    %p183 = scmp.eq.s32.totalorder %s14, 1
    %p184 = scmp.ne.s32.totalorder %s179, %s181
    %p185 = scmp.eq.s32.totalorder %s14, 0
    %p186 = por %p184, %p185
    %p187 = scmp.ne.s32.totalorder %s179, %s181
    %p188 = scmp.eq.s32.totalorder %s19, 1
    %p189 = por %p187, %p188
    %p190 = scmp.ne.s32.totalorder %s181, %s182
    %p191 = scmp.eq.s32.totalorder %s19, 0
    %p192 = por %p190, %p191
    %p193 = scmp.ne.s32.totalorder %s181, %s182
    %p194 = scmp.eq.s32.totalorder %s20, 1
    %p195 = por %p193, %p194
    %p197 = scmp.ne.s32.totalorder %s182, %s196
    %p198 = scmp.eq.s32.totalorder %s20, 0
    %p199 = por %p197, %p198
    %s200 = ssub.s32 %s14, %s21
    %p201 = scmp.eq.s32.totalorder %s200, 0
    %s203 = sadd.s32 %s202, 1
    %s204 = scalar_select %p201, %s202, %s203
    %p207 = pneg %p201
    %p208 = scmp.eq.s32.totalorder %s14, 1
    %p209 = por %p207, %p208
    %p210 = scmp.ne.s32.totalorder %s202, %s205
    %p211 = scmp.eq.s32.totalorder %s14, 0
    %p212 = por %p210, %p211
    %p213 = scmp.ne.s32.totalorder %s202, %s205
    %p214 = scmp.eq.s32.totalorder %s19, 1
    %p215 = por %p213, %p214
    %p216 = scmp.ne.s32.totalorder %s205, %s206
    %p217 = scmp.eq.s32.totalorder %s19, 0
    %p218 = por %p216, %p217
    %p219 = scmp.ne.s32.totalorder %s205, %s206
    %p220 = scmp.eq.s32.totalorder %s20, 1
    %p221 = por %p219, %p220
    %p223 = scmp.ne.s32.totalorder %s206, %s222
    %p224 = scmp.eq.s32.totalorder %s20, 0
    %p225 = por %p223, %p224
    %p226 = scmp.le.s32.totalorder 1, %s14
    %p227 = scmp.lt.s32.totalorder %s14, 3
    %p228 = pnand %p226, %p227
    %p229 = pneg %p228
    // Predicated region
    $region9: #{pnl_forward.1} parent=5 // pred_check
      _
    $region10: #{pnl_forward.1} parent=5 // pred_check_branch
      %231 = sbr.rel (%p228) target = $region12
    $region11: #{pnl_forward.1} parent=5 // pred_region
      %s232 = ssub.s32 %s14, 1
      // Predicated region
      $region13: #{pnl_forward.1} parent=11 // pred_check
        %p233 = pneg %p87
      $region14: #{pnl_forward.1} parent=11 // pred_check_branch
        %235 = sbr.rel (%p233) target = $region16
      $region15: #{pnl_forward.1} parent=11 // pred_region
        _
      $region16: #{pnl_forward.1} parent=11 // pred_fallthru
        _
      // Predicated region
      $region17: #{pnl_forward.1} parent=11 // pred_check
        %p236 = pneg %p108
      $region18: #{pnl_forward.1} parent=11 // pred_check_branch
        %238 = sbr.rel (%p236) target = $region20
      $region19: #{pnl_forward.1} parent=11 // pred_region
        _
      $region20: #{pnl_forward.1} parent=11 // pred_fallthru
        _
      // Predicated region
      $region21: #{pnl_forward.1} parent=11 // pred_check
        %p239 = pneg %p129
      $region22: #{pnl_forward.1} parent=11 // pred_check_branch
        %241 = sbr.rel (%p239) target = $region24
      $region23: #{pnl_forward.1} parent=11 // pred_region
        _
      $region24: #{pnl_forward.1} parent=11 // pred_fallthru
        _
      // Predicated region
      $region25: #{pnl_forward.1} parent=11 // pred_check
        %p242 = pneg %p150
      $region26: #{pnl_forward.1} parent=11 // pred_check_branch
        %244 = sbr.rel (%p242) target = $region28
      $region27: #{pnl_forward.1} parent=11 // pred_region
        _
      $region28: #{pnl_forward.1} parent=11 // pred_fallthru
        _
      // Predicated region
      $region29: #{pnl_forward.1} parent=11 // pred_check
        %p245 = pneg %p171
      $region30: #{pnl_forward.1} parent=11 // pred_check_branch
        %247 = sbr.rel (%p245) target = $region32
      $region31: #{pnl_forward.1} parent=11 // pred_region
        _
      $region32: #{pnl_forward.1} parent=11 // pred_fallthru
        _
      // Predicated region
      $region33: #{pnl_forward.1} parent=11 // pred_check
        %p248 = pneg %p192
      $region34: #{pnl_forward.1} parent=11 // pred_check_branch
        %250 = sbr.rel (%p248) target = $region36
      $region35: #{pnl_forward.1} parent=11 // pred_region
        _
      $region36: #{pnl_forward.1} parent=11 // pred_fallthru
        _
    $region12: #{pnl_forward.1} parent=5 // pred_fallthru
      _
    %p251 = scmp.lt.s32.totalorder %s14, 2
    // Predicated region
    $region37: #{pnl_forward.1} parent=5 // pred_check
      %p252 = pneg %p251
    $region38: #{pnl_forward.1} parent=5 // pred_check_branch
      %254 = sbr.rel (%p252) target = $region40
    $region39: #{pnl_forward.1} parent=5 // pred_region
      // Predicated region
      $region41: #{pnl_forward.1} parent=39 // pred_check
        %p255 = pneg %p34
      $region42: #{pnl_forward.1} parent=39 // pred_check_branch
        %257 = sbr.rel (%p255) target = $region44
      $region43: #{pnl_forward.1} parent=39 // pred_region
        %p258 = scmp.lt.s32.totalorder %s14, 1
        %s259 = scalar_select %p258, %s14, 1
        %s260 = smul.addr %s259, 64
        %s261 = smul.addr %s260, 8
        %s262 = scalar_lea.vmem %s0, %s261
      $region44: #{pnl_forward.1} parent=39 // pred_fallthru
        _
      // Predicated region
      $region45: #{pnl_forward.1} parent=39 // pred_check
        %p263 = pneg %p60
      $region46: #{pnl_forward.1} parent=39 // pred_check_branch
        %265 = sbr.rel (%p263) target = $region48
      $region47: #{pnl_forward.1} parent=39 // pred_region
        %p266 = scmp.lt.s32.totalorder %s14, 1
        %s267 = scalar_select %p266, %s14, 1
        %s268 = smul.addr %s267, 64
        %s269 = smul.addr %s268, 8
        %s270 = scalar_lea.vmem %s1, %s269
      $region48: #{pnl_forward.1} parent=39 // pred_fallthru
        _
    $region40: #{pnl_forward.1} parent=5 // pred_fallthru
      _
    %p271 = scmp.le.s32.totalorder 1, %s14
    %p272 = scmp.lt.s32.totalorder %s14, 3
    %p273 = pnand %p271, %p272
    %p274 = pneg %p273
    // Predicated region
    $region49: #{pnl_forward.1} parent=5 // pred_check
      _
    $region50: #{pnl_forward.1} parent=5 // pred_check_branch
      %276 = sbr.rel (%p273) target = $region52
    $region51: #{pnl_forward.1} parent=5 // pred_region
      %s277 = ssub.s32 %s14, 1
      %p278 = scmp.lt.s32.totalorder %s19, 1
      %s279 = scalar_select %p278, %s19, 1
      %s280 = smul.addr %s279, 64
      %s281 = smul.addr %s280, 8
      %s282 = scalar_lea.vmem %s0, %s281
      %p283 = pneg %p40
      %p284 = pneg %p37
      %p285 = scmp.lt.s32.totalorder %s19, 1
      %s286 = scalar_select %p285, %s19, 1
      %s287 = smul.addr %s286, 64
      %s288 = smul.addr %s287, 8
      %s289 = scalar_lea.vmem %s1, %s288
      %p290 = pneg %p66
      %p291 = pneg %p63
      %p292 = pneg %p87
      %p293 = pneg %p84
      %p294 = pneg %p108
      %p295 = pneg %p105
      %p296 = pneg %p129
      %p297 = pneg %p126
      %p298 = pneg %p150
      %p299 = pneg %p147
      %p300 = pneg %p171
      %p301 = pneg %p168
      %p302 = pneg %p192
      %p303 = pneg %p189
      %p304 = pneg %p218
      %p305 = pneg %p215
      %p306 = scmp.lt.s32.totalorder %s19, 1
      %s307 = scalar_select %p306, %s19, 1
      %s308 = smul.addr %s307, 64
      %s309 = smul.addr %s308, 8
      %s310 = scalar_lea.vmem %s8, %s309
      %p311 = scmp.lt.s32.totalorder %s19, 1
      %s312 = scalar_select %p311, %s19, 1
      %s313 = smul.addr %s312, 64
      %s314 = smul.addr %s313, 8
      %s315 = scalar_lea.vmem %s0, %s314
      %p316 = scmp.lt.s32.totalorder %s19, 1
      %s317 = scalar_select %p316, %s19, 1
      %s318 = smul.addr %s317, 64
      %s319 = smul.addr %s318, 8
      %s320 = scalar_lea.vmem %s1, %s319
      %p321 = scmp.lt.s32.totalorder %s19, 1
      %s322 = scalar_select %p321, %s19, 1
      %s323 = smul.addr %s322, 64
      %s324 = smul.addr %s323, 8
      %s325 = scalar_lea.vmem %s8, %s324
      %v327 = vld [vmem:[%s315] sm:$0xff]
      %v328 = vld [vmem:[%s315 + $0x8] sm:$0xff]
      %v329 = vld [vmem:[%s315 + $0x10] sm:$0xff]
      %v330 = vld [vmem:[%s315 + $0x18] sm:$0xff]
      %v331 = vld [vmem:[%s315 + $0x20] sm:$0xff]
      %v332 = vld [vmem:[%s315 + $0x28] sm:$0xff]
      %v333 = vld [vmem:[%s315 + $0x30] sm:$0xff]
      %v334 = vld [vmem:[%s315 + $0x38] sm:$0xff]
      %v335 = vld [vmem:[%s315 + $0x40] sm:$0xff]
      %v336 = vld [vmem:[%s315 + $0x48] sm:$0xff]
      %v337 = vld [vmem:[%s315 + $0x50] sm:$0xff]
      %v338 = vld [vmem:[%s315 + $0x58] sm:$0xff]
      %v339 = vld [vmem:[%s315 + $0x60] sm:$0xff]
      %v340 = vld [vmem:[%s315 + $0x68] sm:$0xff]
      %v341 = vld [vmem:[%s315 + $0x70] sm:$0xff]
      %v342 = vld [vmem:[%s315 + $0x78] sm:$0xff]
      %v343 = vld [vmem:[%s315 + $0x80] sm:$0xff]
      %v344 = vld [vmem:[%s315 + $0x88] sm:$0xff]
      %v345 = vld [vmem:[%s315 + $0x90] sm:$0xff]
      %v346 = vld [vmem:[%s315 + $0x98] sm:$0xff]
      %v347 = vld [vmem:[%s315 + $0xa0] sm:$0xff]
      %v348 = vld [vmem:[%s315 + $0xa8] sm:$0xff]
      %v349 = vld [vmem:[%s315 + $0xb0] sm:$0xff]
      %v350 = vld [vmem:[%s315 + $0xb8] sm:$0xff]
      %v351 = vld [vmem:[%s315 + $0xc0] sm:$0xff]
      %v352 = vld [vmem:[%s315 + $0xc8] sm:$0xff]
      %v353 = vld [vmem:[%s315 + $0xd0] sm:$0xff]
      %v354 = vld [vmem:[%s315 + $0xd8] sm:$0xff]
      %v355 = vld [vmem:[%s315 + $0xe0] sm:$0xff]
      %v356 = vld [vmem:[%s315 + $0xe8] sm:$0xff]
      %v357 = vld [vmem:[%s315 + $0xf0] sm:$0xff]
      %v358 = vld [vmem:[%s315 + $0xf8] sm:$0xff]
      %v359 = vld [vmem:[%s315 + $0x100] sm:$0xff]
      %v360 = vld [vmem:[%s315 + $0x108] sm:$0xff]
      %v361 = vld [vmem:[%s315 + $0x110] sm:$0xff]
      %v362 = vld [vmem:[%s315 + $0x118] sm:$0xff]
      %v363 = vld [vmem:[%s315 + $0x120] sm:$0xff]
      %v364 = vld [vmem:[%s315 + $0x128] sm:$0xff]
      %v365 = vld [vmem:[%s315 + $0x130] sm:$0xff]
      %v366 = vld [vmem:[%s315 + $0x138] sm:$0xff]
      %v367 = vld [vmem:[%s315 + $0x140] sm:$0xff]
      %v368 = vld [vmem:[%s315 + $0x148] sm:$0xff]
      %v369 = vld [vmem:[%s315 + $0x150] sm:$0xff]
      %v370 = vld [vmem:[%s315 + $0x158] sm:$0xff]
      %v371 = vld [vmem:[%s315 + $0x160] sm:$0xff]
      %v372 = vld [vmem:[%s315 + $0x168] sm:$0xff]
      %v373 = vld [vmem:[%s315 + $0x170] sm:$0xff]
      %v374 = vld [vmem:[%s315 + $0x178] sm:$0xff]
      %v375 = vld [vmem:[%s315 + $0x180] sm:$0xff]
      %v376 = vld [vmem:[%s315 + $0x188] sm:$0xff]
      %v377 = vld [vmem:[%s315 + $0x190] sm:$0xff]
      %v378 = vld [vmem:[%s315 + $0x198] sm:$0xff]
      %v379 = vld [vmem:[%s315 + $0x1a0] sm:$0xff]
      %v380 = vld [vmem:[%s315 + $0x1a8] sm:$0xff]
      %v381 = vld [vmem:[%s315 + $0x1b0] sm:$0xff]
      %v382 = vld [vmem:[%s315 + $0x1b8] sm:$0xff]
      %v383 = vld [vmem:[%s315 + $0x1c0] sm:$0xff]
      %v384 = vld [vmem:[%s315 + $0x1c8] sm:$0xff]
      %v385 = vld [vmem:[%s315 + $0x1d0] sm:$0xff]
      %v386 = vld [vmem:[%s315 + $0x1d8] sm:$0xff]
      %v387 = vld [vmem:[%s315 + $0x1e0] sm:$0xff]
      %v388 = vld [vmem:[%s315 + $0x1e8] sm:$0xff]
      %v389 = vld [vmem:[%s315 + $0x1f0] sm:$0xff]
      %v390 = vld [vmem:[%s315 + $0x1f8] sm:$0xff]
      %v391 = vpack.c.bf16 %v329, %v327
      %v392 = vpack.c.bf16 %v330, %v328
      %v393 = vpack.c.bf16 %v333, %v331
      %v394 = vpack.c.bf16 %v334, %v332
      %v395 = vpack.c.bf16 %v337, %v335
      %v396 = vpack.c.bf16 %v338, %v336
      %v397 = vpack.c.bf16 %v341, %v339
      %v398 = vpack.c.bf16 %v342, %v340
      %v399 = vpack.c.bf16 %v345, %v343
      %v400 = vpack.c.bf16 %v346, %v344
      %v401 = vpack.c.bf16 %v349, %v347
      %v402 = vpack.c.bf16 %v350, %v348
      %v403 = vpack.c.bf16 %v353, %v351
      %v404 = vpack.c.bf16 %v354, %v352
      %v405 = vpack.c.bf16 %v357, %v355
      %v406 = vpack.c.bf16 %v358, %v356
      %v407 = vpack.c.bf16 %v361, %v359
      %v408 = vpack.c.bf16 %v362, %v360
      %v409 = vpack.c.bf16 %v365, %v363
      %v410 = vpack.c.bf16 %v366, %v364
      %v411 = vpack.c.bf16 %v369, %v367
      %v412 = vpack.c.bf16 %v370, %v368
      %v413 = vpack.c.bf16 %v373, %v371
      %v414 = vpack.c.bf16 %v374, %v372
      %v415 = vpack.c.bf16 %v377, %v375
      %v416 = vpack.c.bf16 %v378, %v376
      %v417 = vpack.c.bf16 %v381, %v379
      %v418 = vpack.c.bf16 %v382, %v380
      %v419 = vpack.c.bf16 %v385, %v383
      %v420 = vpack.c.bf16 %v386, %v384
      %v421 = vpack.c.bf16 %v389, %v387
      %v422 = vpack.c.bf16 %v390, %v388
      %v423 = vld [vmem:[%s320] sm:$0xff]
      %v424 = vld [vmem:[%s320 + $0x8] sm:$0xff]
      %v425 = vld [vmem:[%s320 + $0x10] sm:$0xff]
      %v426 = vld [vmem:[%s320 + $0x18] sm:$0xff]
      %v427 = vld [vmem:[%s320 + $0x20] sm:$0xff]
      %v428 = vld [vmem:[%s320 + $0x28] sm:$0xff]
      %v429 = vld [vmem:[%s320 + $0x30] sm:$0xff]
      %v430 = vld [vmem:[%s320 + $0x38] sm:$0xff]
      %v431 = vld [vmem:[%s320 + $0x40] sm:$0xff]
      %v432 = vld [vmem:[%s320 + $0x48] sm:$0xff]
      %v433 = vld [vmem:[%s320 + $0x50] sm:$0xff]
      %v434 = vld [vmem:[%s320 + $0x58] sm:$0xff]
      %v435 = vld [vmem:[%s320 + $0x60] sm:$0xff]
      %v436 = vld [vmem:[%s320 + $0x68] sm:$0xff]
      %v437 = vld [vmem:[%s320 + $0x70] sm:$0xff]
      %v438 = vld [vmem:[%s320 + $0x78] sm:$0xff]
      %v439 = vld [vmem:[%s320 + $0x80] sm:$0xff]
      %v440 = vld [vmem:[%s320 + $0x88] sm:$0xff]
      %v441 = vld [vmem:[%s320 + $0x90] sm:$0xff]
      %v442 = vld [vmem:[%s320 + $0x98] sm:$0xff]
      %v443 = vld [vmem:[%s320 + $0xa0] sm:$0xff]
      %v444 = vld [vmem:[%s320 + $0xa8] sm:$0xff]
      %v445 = vld [vmem:[%s320 + $0xb0] sm:$0xff]
      %v446 = vld [vmem:[%s320 + $0xb8] sm:$0xff]
      %v447 = vld [vmem:[%s320 + $0xc0] sm:$0xff]
      %v448 = vld [vmem:[%s320 + $0xc8] sm:$0xff]
      %v449 = vld [vmem:[%s320 + $0xd0] sm:$0xff]
      %v450 = vld [vmem:[%s320 + $0xd8] sm:$0xff]
      %v451 = vld [vmem:[%s320 + $0xe0] sm:$0xff]
      %v452 = vld [vmem:[%s320 + $0xe8] sm:$0xff]
      %v453 = vld [vmem:[%s320 + $0xf0] sm:$0xff]
      %v454 = vld [vmem:[%s320 + $0xf8] sm:$0xff]
      %v455 = vld [vmem:[%s320 + $0x100] sm:$0xff]
      %v456 = vld [vmem:[%s320 + $0x108] sm:$0xff]
      %v457 = vld [vmem:[%s320 + $0x110] sm:$0xff]
      %v458 = vld [vmem:[%s320 + $0x118] sm:$0xff]
      %v459 = vld [vmem:[%s320 + $0x120] sm:$0xff]
      %v460 = vld [vmem:[%s320 + $0x128] sm:$0xff]
      %v461 = vld [vmem:[%s320 + $0x130] sm:$0xff]
      %v462 = vld [vmem:[%s320 + $0x138] sm:$0xff]
      %v463 = vld [vmem:[%s320 + $0x140] sm:$0xff]
      %v464 = vld [vmem:[%s320 + $0x148] sm:$0xff]
      %v465 = vld [vmem:[%s320 + $0x150] sm:$0xff]
      %v466 = vld [vmem:[%s320 + $0x158] sm:$0xff]
      %v467 = vld [vmem:[%s320 + $0x160] sm:$0xff]
      %v468 = vld [vmem:[%s320 + $0x168] sm:$0xff]
      %v469 = vld [vmem:[%s320 + $0x170] sm:$0xff]
      %v470 = vld [vmem:[%s320 + $0x178] sm:$0xff]
      %v471 = vld [vmem:[%s320 + $0x180] sm:$0xff]
      %v472 = vld [vmem:[%s320 + $0x188] sm:$0xff]
      %v473 = vld [vmem:[%s320 + $0x190] sm:$0xff]
      %v474 = vld [vmem:[%s320 + $0x198] sm:$0xff]
      %v475 = vld [vmem:[%s320 + $0x1a0] sm:$0xff]
      %v476 = vld [vmem:[%s320 + $0x1a8] sm:$0xff]
      %v477 = vld [vmem:[%s320 + $0x1b0] sm:$0xff]
      %v478 = vld [vmem:[%s320 + $0x1b8] sm:$0xff]
      %v479 = vld [vmem:[%s320 + $0x1c0] sm:$0xff]
      %v480 = vld [vmem:[%s320 + $0x1c8] sm:$0xff]
      %v481 = vld [vmem:[%s320 + $0x1d0] sm:$0xff]
      %v482 = vld [vmem:[%s320 + $0x1d8] sm:$0xff]
      %v483 = vld [vmem:[%s320 + $0x1e0] sm:$0xff]
      %v484 = vld [vmem:[%s320 + $0x1e8] sm:$0xff]
      %v485 = vld [vmem:[%s320 + $0x1f0] sm:$0xff]
      %v486 = vld [vmem:[%s320 + $0x1f8] sm:$0xff]
      %v487 = vpack.c.bf16 %v425, %v423
      %v488 = vpack.c.bf16 %v426, %v424
      %v489 = vpack.c.bf16 %v429, %v427
      %v490 = vpack.c.bf16 %v430, %v428
      %v491 = vpack.c.bf16 %v433, %v431
      %v492 = vpack.c.bf16 %v434, %v432
      %v493 = vpack.c.bf16 %v437, %v435
      %v494 = vpack.c.bf16 %v438, %v436
      %v495 = vpack.c.bf16 %v441, %v439
      %v496 = vpack.c.bf16 %v442, %v440
      %v497 = vpack.c.bf16 %v445, %v443
      %v498 = vpack.c.bf16 %v446, %v444
      %v499 = vpack.c.bf16 %v449, %v447
      %v500 = vpack.c.bf16 %v450, %v448
      %v501 = vpack.c.bf16 %v453, %v451
      %v502 = vpack.c.bf16 %v454, %v452
      %v503 = vpack.c.bf16 %v457, %v455
      %v504 = vpack.c.bf16 %v458, %v456
      %v505 = vpack.c.bf16 %v461, %v459
      %v506 = vpack.c.bf16 %v462, %v460
      %v507 = vpack.c.bf16 %v465, %v463
      %v508 = vpack.c.bf16 %v466, %v464
      %v509 = vpack.c.bf16 %v469, %v467
      %v510 = vpack.c.bf16 %v470, %v468
      %v511 = vpack.c.bf16 %v473, %v471
      %v512 = vpack.c.bf16 %v474, %v472
      %v513 = vpack.c.bf16 %v477, %v475
      %v514 = vpack.c.bf16 %v478, %v476
      %v515 = vpack.c.bf16 %v481, %v479
      %v516 = vpack.c.bf16 %v482, %v480
      %v517 = vpack.c.bf16 %v485, %v483
      %v518 = vpack.c.bf16 %v486, %v484
      %v519 = vld [vmem:[%s2] sm:$0xff]
      %v520 = vld [vmem:[%s2 + $0x8] sm:$0xff]
      %v521 = vld [vmem:[%s2 + $0x10] sm:$0xff]
      %v522 = vld [vmem:[%s2 + $0x18] sm:$0xff]
      %v523 = vld [vmem:[%s2 + $0x20] sm:$0xff]
      %v524 = vld [vmem:[%s2 + $0x28] sm:$0xff]
      %v525 = vld [vmem:[%s2 + $0x30] sm:$0xff]
      %v526 = vld [vmem:[%s2 + $0x38] sm:$0xff]
      %v527 = vld [vmem:[%s2 + $0x40] sm:$0xff]
      %v528 = vld [vmem:[%s2 + $0x48] sm:$0xff]
      %v529 = vld [vmem:[%s2 + $0x50] sm:$0xff]
      %v530 = vld [vmem:[%s2 + $0x58] sm:$0xff]
      %v531 = vld [vmem:[%s2 + $0x60] sm:$0xff]
      %v532 = vld [vmem:[%s2 + $0x68] sm:$0xff]
      %v533 = vld [vmem:[%s2 + $0x70] sm:$0xff]
      %v534 = vld [vmem:[%s2 + $0x78] sm:$0xff]
      %v535 = vld [vmem:[%s2 + $0x80] sm:$0xff]
      %v536 = vld [vmem:[%s2 + $0x88] sm:$0xff]
      %v537 = vld [vmem:[%s2 + $0x90] sm:$0xff]
      %v538 = vld [vmem:[%s2 + $0x98] sm:$0xff]
      %v539 = vld [vmem:[%s2 + $0xa0] sm:$0xff]
      %v540 = vld [vmem:[%s2 + $0xa8] sm:$0xff]
      %v541 = vld [vmem:[%s2 + $0xb0] sm:$0xff]
      %v542 = vld [vmem:[%s2 + $0xb8] sm:$0xff]
      %v543 = vld [vmem:[%s2 + $0xc0] sm:$0xff]
      %v544 = vld [vmem:[%s2 + $0xc8] sm:$0xff]
      %v545 = vld [vmem:[%s2 + $0xd0] sm:$0xff]
      %v546 = vld [vmem:[%s2 + $0xd8] sm:$0xff]
      %v547 = vld [vmem:[%s2 + $0xe0] sm:$0xff]
      %v548 = vld [vmem:[%s2 + $0xe8] sm:$0xff]
      %v549 = vld [vmem:[%s2 + $0xf0] sm:$0xff]
      %v550 = vld [vmem:[%s2 + $0xf8] sm:$0xff]
      %v551 = vld [vmem:[%s3] sm:$0xff]
      %v552 = vld [vmem:[%s3 + $0x8] sm:$0xff]
      %v553 = vld [vmem:[%s3 + $0x10] sm:$0xff]
      %v554 = vld [vmem:[%s3 + $0x18] sm:$0xff]
      %v555 = vld [vmem:[%s3 + $0x20] sm:$0xff]
      %v556 = vld [vmem:[%s3 + $0x28] sm:$0xff]
      %v557 = vld [vmem:[%s3 + $0x30] sm:$0xff]
      %v558 = vld [vmem:[%s3 + $0x38] sm:$0xff]
      %v559 = vld [vmem:[%s3 + $0x40] sm:$0xff]
      %v560 = vld [vmem:[%s3 + $0x48] sm:$0xff]
      %v561 = vld [vmem:[%s3 + $0x50] sm:$0xff]
      %v562 = vld [vmem:[%s3 + $0x58] sm:$0xff]
      %v563 = vld [vmem:[%s3 + $0x60] sm:$0xff]
      %v564 = vld [vmem:[%s3 + $0x68] sm:$0xff]
      %v565 = vld [vmem:[%s3 + $0x70] sm:$0xff]
      %v566 = vld [vmem:[%s3 + $0x78] sm:$0xff]
      %v567 = vld [vmem:[%s3 + $0x80] sm:$0xff]
      %v568 = vld [vmem:[%s3 + $0x88] sm:$0xff]
      %v569 = vld [vmem:[%s3 + $0x90] sm:$0xff]
      %v570 = vld [vmem:[%s3 + $0x98] sm:$0xff]
      %v571 = vld [vmem:[%s3 + $0xa0] sm:$0xff]
      %v572 = vld [vmem:[%s3 + $0xa8] sm:$0xff]
      %v573 = vld [vmem:[%s3 + $0xb0] sm:$0xff]
      %v574 = vld [vmem:[%s3 + $0xb8] sm:$0xff]
      %v575 = vld [vmem:[%s3 + $0xc0] sm:$0xff]
      %v576 = vld [vmem:[%s3 + $0xc8] sm:$0xff]
      %v577 = vld [vmem:[%s3 + $0xd0] sm:$0xff]
      %v578 = vld [vmem:[%s3 + $0xd8] sm:$0xff]
      %v579 = vld [vmem:[%s3 + $0xe0] sm:$0xff]
      %v580 = vld [vmem:[%s3 + $0xe8] sm:$0xff]
      %v581 = vld [vmem:[%s3 + $0xf0] sm:$0xff]
      %v582 = vld [vmem:[%s3 + $0xf8] sm:$0xff]
      %584 = vset.pattern.permute.xlu0 0
      %585 = vperm.xlu0 %584, %v551
      %v586 = vpop.permute.xlu0 %585
      %589 = vset.pattern.permute.xlu0 0
      %590 = vperm.xlu0 %589, %v552
      %v591 = vpop.permute.xlu0 %590
      %594 = vset.pattern.permute.xlu0 0
      %595 = vperm.xlu0 %594, %v553
      %v596 = vpop.permute.xlu0 %595
      %599 = vset.pattern.permute.xlu0 0
      %600 = vperm.xlu0 %599, %v554
      %v601 = vpop.permute.xlu0 %600
      %604 = vset.pattern.permute.xlu0 0
      %605 = vperm.xlu0 %604, %v555
      %v606 = vpop.permute.xlu0 %605
      %609 = vset.pattern.permute.xlu0 0
      %610 = vperm.xlu0 %609, %v556
      %v611 = vpop.permute.xlu0 %610
      %614 = vset.pattern.permute.xlu0 0
      %615 = vperm.xlu0 %614, %v557
      %v616 = vpop.permute.xlu0 %615
      %619 = vset.pattern.permute.xlu0 0
      %620 = vperm.xlu0 %619, %v558
      %v621 = vpop.permute.xlu0 %620
      %624 = vset.pattern.permute.xlu0 0
      %625 = vperm.xlu0 %624, %v559
      %v626 = vpop.permute.xlu0 %625
      %629 = vset.pattern.permute.xlu0 0
      %630 = vperm.xlu0 %629, %v560
      %v631 = vpop.permute.xlu0 %630
      %634 = vset.pattern.permute.xlu0 0
      %635 = vperm.xlu0 %634, %v561
      %v636 = vpop.permute.xlu0 %635
      %639 = vset.pattern.permute.xlu0 0
      %640 = vperm.xlu0 %639, %v562
      %v641 = vpop.permute.xlu0 %640
      %644 = vset.pattern.permute.xlu0 0
      %645 = vperm.xlu0 %644, %v563
      %v646 = vpop.permute.xlu0 %645
      %649 = vset.pattern.permute.xlu0 0
      %650 = vperm.xlu0 %649, %v564
      %v651 = vpop.permute.xlu0 %650
      %654 = vset.pattern.permute.xlu0 0
      %655 = vperm.xlu0 %654, %v565
      %v656 = vpop.permute.xlu0 %655
      %659 = vset.pattern.permute.xlu0 0
      %660 = vperm.xlu0 %659, %v566
      %v661 = vpop.permute.xlu0 %660
      %664 = vset.pattern.permute.xlu0 0
      %665 = vperm.xlu0 %664, %v567
      %v666 = vpop.permute.xlu0 %665
      %669 = vset.pattern.permute.xlu0 0
      %670 = vperm.xlu0 %669, %v568
      %v671 = vpop.permute.xlu0 %670
      %674 = vset.pattern.permute.xlu0 0
      %675 = vperm.xlu0 %674, %v569
      %v676 = vpop.permute.xlu0 %675
      %679 = vset.pattern.permute.xlu0 0
      %680 = vperm.xlu0 %679, %v570
      %v681 = vpop.permute.xlu0 %680
      %684 = vset.pattern.permute.xlu0 0
      %685 = vperm.xlu0 %684, %v571
      %v686 = vpop.permute.xlu0 %685
      %689 = vset.pattern.permute.xlu0 0
      %690 = vperm.xlu0 %689, %v572
      %v691 = vpop.permute.xlu0 %690
      %694 = vset.pattern.permute.xlu0 0
      %695 = vperm.xlu0 %694, %v573
      %v696 = vpop.permute.xlu0 %695
      %699 = vset.pattern.permute.xlu0 0
      %700 = vperm.xlu0 %699, %v574
      %v701 = vpop.permute.xlu0 %700
      %704 = vset.pattern.permute.xlu0 0
      %705 = vperm.xlu0 %704, %v575
      %v706 = vpop.permute.xlu0 %705
      %709 = vset.pattern.permute.xlu0 0
      %710 = vperm.xlu0 %709, %v576
      %v711 = vpop.permute.xlu0 %710
      %714 = vset.pattern.permute.xlu0 0
      %715 = vperm.xlu0 %714, %v577
      %v716 = vpop.permute.xlu0 %715
      %719 = vset.pattern.permute.xlu0 0
      %720 = vperm.xlu0 %719, %v578
      %v721 = vpop.permute.xlu0 %720
      %724 = vset.pattern.permute.xlu0 0
      %725 = vperm.xlu0 %724, %v579
      %v726 = vpop.permute.xlu0 %725
      %729 = vset.pattern.permute.xlu0 0
      %730 = vperm.xlu0 %729, %v580
      %v731 = vpop.permute.xlu0 %730
      %734 = vset.pattern.permute.xlu0 0
      %735 = vperm.xlu0 %734, %v581
      %v736 = vpop.permute.xlu0 %735
      %739 = vset.pattern.permute.xlu0 0
      %740 = vperm.xlu0 %739, %v582
      %v741 = vpop.permute.xlu0 %740
      %v775 = vunpack.c.l.b16 %v519
      %v776 = vunpack.c.h.b16 %v519
      %v777 = vunpack.c.l.b16 %v520
      %v778 = vunpack.c.h.b16 %v520
      %v779 = vunpack.c.l.b16 %v521
      %v780 = vunpack.c.h.b16 %v521
      %v781 = vunpack.c.l.b16 %v522
      %v782 = vunpack.c.h.b16 %v522
      %v783 = vunpack.c.l.b16 %v523
      %v784 = vunpack.c.h.b16 %v523
      %v785 = vunpack.c.l.b16 %v524
      %v786 = vunpack.c.h.b16 %v524
      %v787 = vunpack.c.l.b16 %v525
      %v788 = vunpack.c.h.b16 %v525
      %v789 = vunpack.c.l.b16 %v526
      %v790 = vunpack.c.h.b16 %v526
      %v791 = vunpack.c.l.b16 %v527
      %v792 = vunpack.c.h.b16 %v527
      %v793 = vunpack.c.l.b16 %v528
      %v794 = vunpack.c.h.b16 %v528
      %v795 = vunpack.c.l.b16 %v529
      %v796 = vunpack.c.h.b16 %v529
      %v797 = vunpack.c.l.b16 %v530
      %v798 = vunpack.c.h.b16 %v530
      %v799 = vunpack.c.l.b16 %v531
      %v800 = vunpack.c.h.b16 %v531
      %v801 = vunpack.c.l.b16 %v532
      %v802 = vunpack.c.h.b16 %v532
      %v803 = vunpack.c.l.b16 %v533
      %v804 = vunpack.c.h.b16 %v533
      %v805 = vunpack.c.l.b16 %v534
      %v806 = vunpack.c.h.b16 %v534
      %v807 = vunpack.c.l.b16 %v535
      %v808 = vunpack.c.h.b16 %v535
      %v809 = vunpack.c.l.b16 %v536
      %v810 = vunpack.c.h.b16 %v536
      %v811 = vunpack.c.l.b16 %v537
      %v812 = vunpack.c.h.b16 %v537
      %v813 = vunpack.c.l.b16 %v538
      %v814 = vunpack.c.h.b16 %v538
      %v815 = vunpack.c.l.b16 %v539
      %v816 = vunpack.c.h.b16 %v539
      %v817 = vunpack.c.l.b16 %v540
      %v818 = vunpack.c.h.b16 %v540
      %v819 = vunpack.c.l.b16 %v541
      %v820 = vunpack.c.h.b16 %v541
      %v821 = vunpack.c.l.b16 %v542
      %v822 = vunpack.c.h.b16 %v542
      %v823 = vunpack.c.l.b16 %v543
      %v824 = vunpack.c.h.b16 %v543
      %v825 = vunpack.c.l.b16 %v544
      %v826 = vunpack.c.h.b16 %v544
      %v827 = vunpack.c.l.b16 %v545
      %v828 = vunpack.c.h.b16 %v545
      %v829 = vunpack.c.l.b16 %v546
      %v830 = vunpack.c.h.b16 %v546
      %v831 = vunpack.c.l.b16 %v547
      %v832 = vunpack.c.h.b16 %v547
      %v833 = vunpack.c.l.b16 %v548
      %v834 = vunpack.c.h.b16 %v548
      %v835 = vunpack.c.l.b16 %v549
      %v836 = vunpack.c.h.b16 %v549
      %v837 = vunpack.c.l.b16 %v550
      %v838 = vunpack.c.h.b16 %v550
      %v839 = vpack.c.b16 %v777, %v775
      %v840 = vpack.c.b16 %v778, %v776
      %v841 = vpack.c.b16 %v781, %v779
      %v842 = vpack.c.b16 %v782, %v780
      %v843 = vpack.c.b16 %v785, %v783
      %v844 = vpack.c.b16 %v786, %v784
      %v845 = vpack.c.b16 %v789, %v787
      %v846 = vpack.c.b16 %v790, %v788
      %v847 = vpack.c.b16 %v793, %v791
      %v848 = vpack.c.b16 %v794, %v792
      %v849 = vpack.c.b16 %v797, %v795
      %v850 = vpack.c.b16 %v798, %v796
      %v851 = vpack.c.b16 %v801, %v799
      %v852 = vpack.c.b16 %v802, %v800
      %v853 = vpack.c.b16 %v805, %v803
      %v854 = vpack.c.b16 %v806, %v804
      %v855 = vpack.c.b16 %v809, %v807
      %v856 = vpack.c.b16 %v810, %v808
      %v857 = vpack.c.b16 %v813, %v811
      %v858 = vpack.c.b16 %v814, %v812
      %v859 = vpack.c.b16 %v817, %v815
      %v860 = vpack.c.b16 %v818, %v816
      %v861 = vpack.c.b16 %v821, %v819
      %v862 = vpack.c.b16 %v822, %v820
      %v863 = vpack.c.b16 %v825, %v823
      %v864 = vpack.c.b16 %v826, %v824
      %v865 = vpack.c.b16 %v829, %v827
      %v866 = vpack.c.b16 %v830, %v828
      %v867 = vpack.c.b16 %v833, %v831
      %v868 = vpack.c.b16 %v834, %v832
      %v869 = vpack.c.b16 %v837, %v835
      %v870 = vpack.c.b16 %v838, %v836
      %903 = vmatprep.subr.bf16.mxu0 %v488
      %904 = vmatpush1.bf16.msra.mxu0 %v487
      %905 = vmatprep.subr.bf16.mxu0 %v490
      %906 = vmatpush1.bf16.msra.mxu0 %v489
      %907 = vmatprep.subr.bf16.mxu0 %v492
      %908 = vmatpush1.bf16.msra.mxu0 %v491
      %909 = vmatprep.subr.bf16.mxu0 %v494
      %910 = vmatpush1.bf16.msra.mxu0 %v493
      %911 = vmatprep.subr.bf16.mxu0 %v496
      %912 = vmatpush1.bf16.msra.mxu0 %v495
      %913 = vmatprep.subr.bf16.mxu0 %v498
      %914 = vmatpush1.bf16.msra.mxu0 %v497
      %915 = vmatprep.subr.bf16.mxu0 %v500
      %916 = vmatpush1.bf16.msra.mxu0 %v499
      %917 = vmatprep.subr.bf16.mxu0 %v502
      %918 = vmatpush1.bf16.msra.mxu0 %v501
      %919 = vmatprep.subr.bf16.mxu0 %v504
      %920 = vmatpush1.bf16.msra.mxu0 %v503
      %921 = vmatprep.subr.bf16.mxu0 %v506
      %922 = vmatpush1.bf16.msra.mxu0 %v505
      %923 = vmatprep.subr.bf16.mxu0 %v508
      %924 = vmatpush1.bf16.msra.mxu0 %v507
      %925 = vmatprep.subr.bf16.mxu0 %v510
      %926 = vmatpush1.bf16.msra.mxu0 %v509
      %927 = vmatprep.subr.bf16.mxu0 %v512
      %928 = vmatpush1.bf16.msra.mxu0 %v511
      %929 = vmatprep.subr.bf16.mxu0 %v514
      %930 = vmatpush1.bf16.msra.mxu0 %v513
      %931 = vmatprep.subr.bf16.mxu0 %v516
      %932 = vmatpush1.bf16.msra.mxu0 %v515
      %933 = vmatprep.subr.bf16.mxu0 %v518
      %934 = vmatpush1.bf16.msra.mxu0 %v517
      %935 = vmatprep.mubr.bf16.mxu0 %v840
      %936 = vmatmul.mubr.bf16.gmra.mrb[0].mxu0 %v839
      %v937 = vpop.f32.mrb[0].mxu0
      %v938 = vadd.f32 %v586, %v937
      %v939 = vpop.f32.mrb[0].mxu0
      %v940 = vadd.f32 %v586, %v939
      %v941 = vpop.f32.mrb[0].mxu0
      %v942 = vadd.f32 %v591, %v941
      %v943 = vpop.f32.mrb[0].mxu0
      %v944 = vadd.f32 %v591, %v943
      %945 = vmatprep.mubr.bf16.mxu0 %v842
      %946 = vmatmul.mubr.bf16.gmra.mrb[0].mxu0 %v841
      %v947 = vpop.f32.mrb[0].mxu0
      %v948 = vadd.f32 %v596, %v947
      %v949 = vpop.f32.mrb[0].mxu0
      %v950 = vadd.f32 %v596, %v949
      %v951 = vpop.f32.mrb[0].mxu0
      %v952 = vadd.f32 %v601, %v951
      %v953 = vpop.f32.mrb[0].mxu0
      %v954 = vadd.f32 %v601, %v953
      %955 = vmatprep.mubr.bf16.mxu0 %v844
      %956 = vmatmul.mubr.bf16.gmra.mrb[0].mxu0 %v843
      %v957 = vpop.f32.mrb[0].mxu0
      %v958 = vadd.f32 %v606, %v957
      %v959 = vpop.f32.mrb[0].mxu0
      %v960 = vadd.f32 %v606, %v959
      %v961 = vpop.f32.mrb[0].mxu0
      %v962 = vadd.f32 %v611, %v961
      %v963 = vpop.f32.mrb[0].mxu0
      %v964 = vadd.f32 %v611, %v963
      %965 = vmatprep.mubr.bf16.mxu0 %v846
      %966 = vmatmul.mubr.bf16.gmra.mrb[0].mxu0 %v845
      %v967 = vpop.f32.mrb[0].mxu0
      %v968 = vadd.f32 %v616, %v967
      %v969 = vpop.f32.mrb[0].mxu0
      %v970 = vadd.f32 %v616, %v969
      %v971 = vpop.f32.mrb[0].mxu0
      %v972 = vadd.f32 %v621, %v971
      %v973 = vpop.f32.mrb[0].mxu0
      %v974 = vadd.f32 %v621, %v973
      %975 = vmatprep.mubr.bf16.mxu0 %v848
      %976 = vmatmul.mubr.bf16.gmra.mrb[0].mxu0 %v847
      %v977 = vpop.f32.mrb[0].mxu0
      %v978 = vadd.f32 %v626, %v977
      %v979 = vpop.f32.mrb[0].mxu0
      %v980 = vadd.f32 %v626, %v979
      %v981 = vpop.f32.mrb[0].mxu0
      %v982 = vadd.f32 %v631, %v981
      %v983 = vpop.f32.mrb[0].mxu0
      %v984 = vadd.f32 %v631, %v983
      %985 = vmatprep.mubr.bf16.mxu0 %v850
      %986 = vmatmul.mubr.bf16.gmra.mrb[0].mxu0 %v849
      %v987 = vpop.f32.mrb[0].mxu0
      %v988 = vadd.f32 %v636, %v987
      %v989 = vpop.f32.mrb[0].mxu0
      %v990 = vadd.f32 %v636, %v989
      %v991 = vpop.f32.mrb[0].mxu0
      %v992 = vadd.f32 %v641, %v991
      %v993 = vpop.f32.mrb[0].mxu0
      %v994 = vadd.f32 %v641, %v993
      %995 = vmatprep.mubr.bf16.mxu0 %v852
      %996 = vmatmul.mubr.bf16.gmra.mrb[0].mxu0 %v851
      %v997 = vpop.f32.mrb[0].mxu0
      %v998 = vadd.f32 %v646, %v997
      %v999 = vpop.f32.mrb[0].mxu0
      %v1000 = vadd.f32 %v646, %v999
      %v1001 = vpop.f32.mrb[0].mxu0
      %v1002 = vadd.f32 %v651, %v1001
      %v1003 = vpop.f32.mrb[0].mxu0
      %v1004 = vadd.f32 %v651, %v1003
      %1005 = vmatprep.mubr.bf16.mxu0 %v854
      %1006 = vmatmul.mubr.bf16.gmra.mrb[0].mxu0 %v853
      %v1007 = vpop.f32.mrb[0].mxu0
      %v1008 = vadd.f32 %v656, %v1007
      %v1009 = vpop.f32.mrb[0].mxu0
      %v1010 = vadd.f32 %v656, %v1009
      %v1011 = vpop.f32.mrb[0].mxu0
      %v1012 = vadd.f32 %v661, %v1011
      %v1013 = vpop.f32.mrb[0].mxu0
      %v1014 = vadd.f32 %v661, %v1013
      %1015 = vmatprep.mubr.bf16.mxu0 %v856
      %1016 = vmatmul.mubr.bf16.gmra.mrb[0].mxu0 %v855
      %v1017 = vpop.f32.mrb[0].mxu0
      %v1018 = vadd.f32 %v666, %v1017
      %v1019 = vpop.f32.mrb[0].mxu0
      %v1020 = vadd.f32 %v666, %v1019
      %v1021 = vpop.f32.mrb[0].mxu0
      %v1022 = vadd.f32 %v671, %v1021
      %v1023 = vpop.f32.mrb[0].mxu0
      %v1024 = vadd.f32 %v671, %v1023
      %1025 = vmatprep.mubr.bf16.mxu0 %v858
      %1026 = vmatmul.mubr.bf16.gmra.mrb[0].mxu0 %v857
      %v1027 = vpop.f32.mrb[0].mxu0
      %v1028 = vadd.f32 %v676, %v1027
      %v1029 = vpop.f32.mrb[0].mxu0
      %v1030 = vadd.f32 %v676, %v1029
      %v1031 = vpop.f32.mrb[0].mxu0
      %v1032 = vadd.f32 %v681, %v1031
      %v1033 = vpop.f32.mrb[0].mxu0
      %v1034 = vadd.f32 %v681, %v1033
      %1035 = vmatprep.mubr.bf16.mxu0 %v860
      %1036 = vmatmul.mubr.bf16.gmra.mrb[0].mxu0 %v859
      %v1037 = vpop.f32.mrb[0].mxu0
      %v1038 = vadd.f32 %v686, %v1037
      %v1039 = vpop.f32.mrb[0].mxu0
      %v1040 = vadd.f32 %v686, %v1039
      %v1041 = vpop.f32.mrb[0].mxu0
      %v1042 = vadd.f32 %v691, %v1041
      %v1043 = vpop.f32.mrb[0].mxu0
      %v1044 = vadd.f32 %v691, %v1043
      %1045 = vmatprep.mubr.bf16.mxu0 %v862
      %1046 = vmatmul.mubr.bf16.gmra.mrb[0].mxu0 %v861
      %v1047 = vpop.f32.mrb[0].mxu0
      %v1048 = vadd.f32 %v696, %v1047
      %v1049 = vpop.f32.mrb[0].mxu0
      %v1050 = vadd.f32 %v696, %v1049
      %v1051 = vpop.f32.mrb[0].mxu0
      %v1052 = vadd.f32 %v701, %v1051
      %v1053 = vpop.f32.mrb[0].mxu0
      %v1054 = vadd.f32 %v701, %v1053
      %1055 = vmatprep.mubr.bf16.mxu0 %v864
      %1056 = vmatmul.mubr.bf16.gmra.mrb[0].mxu0 %v863
      %v1057 = vpop.f32.mrb[0].mxu0
      %v1058 = vadd.f32 %v706, %v1057
      %v1059 = vpop.f32.mrb[0].mxu0
      %v1060 = vadd.f32 %v706, %v1059
      %v1061 = vpop.f32.mrb[0].mxu0
      %v1062 = vadd.f32 %v711, %v1061
      %v1063 = vpop.f32.mrb[0].mxu0
      %v1064 = vadd.f32 %v711, %v1063
      %1065 = vmatprep.mubr.bf16.mxu0 %v866
      %1066 = vmatmul.mubr.bf16.gmra.mrb[0].mxu0 %v865
      %v1067 = vpop.f32.mrb[0].mxu0
      %v1068 = vadd.f32 %v716, %v1067
      %v1069 = vpop.f32.mrb[0].mxu0
      %v1070 = vadd.f32 %v716, %v1069
      %v1071 = vpop.f32.mrb[0].mxu0
      %v1072 = vadd.f32 %v721, %v1071
      %v1073 = vpop.f32.mrb[0].mxu0
      %v1074 = vadd.f32 %v721, %v1073
      %1075 = vmatprep.mubr.bf16.mxu0 %v868
      %1076 = vmatmul.mubr.bf16.gmra.mrb[0].mxu0 %v867
      %v1077 = vpop.f32.mrb[0].mxu0
      %v1078 = vadd.f32 %v726, %v1077
      %v1079 = vpop.f32.mrb[0].mxu0
      %v1080 = vadd.f32 %v726, %v1079
      %v1081 = vpop.f32.mrb[0].mxu0
      %v1082 = vadd.f32 %v731, %v1081
      %v1083 = vpop.f32.mrb[0].mxu0
      %v1084 = vadd.f32 %v731, %v1083
      %1085 = vmatprep.mubr.bf16.mxu0 %v870
      %1086 = vmatmul.mubr.bf16.gmra.mrb[0].mxu0 %v869
      %v1087 = vpop.f32.mrb[0].mxu0
      %v1088 = vadd.f32 %v736, %v1087
      %v1089 = vpop.f32.mrb[0].mxu0
      %v1090 = vadd.f32 %v736, %v1089
      %v1091 = vpop.f32.mrb[0].mxu0
      %v1092 = vadd.f32 %v741, %v1091
      %v1093 = vpop.f32.mrb[0].mxu0
      %v1094 = vadd.f32 %v741, %v1093
      %1095 = vdwg.mxu0
      %v1096 = vpack.c.bf16 %v942, %v938
      %v1097 = vpack.c.bf16 %v944, %v940
      %v1098 = vpack.c.bf16 %v952, %v948
      %v1099 = vpack.c.bf16 %v954, %v950
      %v1100 = vpack.c.bf16 %v962, %v958
      %v1101 = vpack.c.bf16 %v964, %v960
      %v1102 = vpack.c.bf16 %v972, %v968
      %v1103 = vpack.c.bf16 %v974, %v970
      %v1104 = vpack.c.bf16 %v982, %v978
      %v1105 = vpack.c.bf16 %v984, %v980
      %v1106 = vpack.c.bf16 %v992, %v988
      %v1107 = vpack.c.bf16 %v994, %v990
      %v1108 = vpack.c.bf16 %v1002, %v998
      %v1109 = vpack.c.bf16 %v1004, %v1000
      %v1110 = vpack.c.bf16 %v1012, %v1008
      %v1111 = vpack.c.bf16 %v1014, %v1010
      %v1112 = vpack.c.bf16 %v1022, %v1018
      %v1113 = vpack.c.bf16 %v1024, %v1020
      %v1114 = vpack.c.bf16 %v1032, %v1028
      %v1115 = vpack.c.bf16 %v1034, %v1030
      %v1116 = vpack.c.bf16 %v1042, %v1038
      %v1117 = vpack.c.bf16 %v1044, %v1040
      %v1118 = vpack.c.bf16 %v1052, %v1048
      %v1119 = vpack.c.bf16 %v1054, %v1050
      %v1120 = vpack.c.bf16 %v1062, %v1058
      %v1121 = vpack.c.bf16 %v1064, %v1060
      %v1122 = vpack.c.bf16 %v1072, %v1068
      %v1123 = vpack.c.bf16 %v1074, %v1070
      %v1124 = vpack.c.bf16 %v1082, %v1078
      %v1125 = vpack.c.bf16 %v1084, %v1080
      %v1126 = vpack.c.bf16 %v1092, %v1088
      %v1127 = vpack.c.bf16 %v1094, %v1090
      %v1128 = vld [vmem:[%s4] sm:$0xff]
      %v1129 = vld [vmem:[%s4 + $0x8] sm:$0xff]
      %v1130 = vld [vmem:[%s4 + $0x10] sm:$0xff]
      %v1131 = vld [vmem:[%s4 + $0x18] sm:$0xff]
      %v1132 = vld [vmem:[%s4 + $0x20] sm:$0xff]
      %v1133 = vld [vmem:[%s4 + $0x28] sm:$0xff]
      %v1134 = vld [vmem:[%s4 + $0x30] sm:$0xff]
      %v1135 = vld [vmem:[%s4 + $0x38] sm:$0xff]
      %v1136 = vld [vmem:[%s4 + $0x40] sm:$0xff]
      %v1137 = vld [vmem:[%s4 + $0x48] sm:$0xff]
      %v1138 = vld [vmem:[%s4 + $0x50] sm:$0xff]
      %v1139 = vld [vmem:[%s4 + $0x58] sm:$0xff]
      %v1140 = vld [vmem:[%s4 + $0x60] sm:$0xff]
      %v1141 = vld [vmem:[%s4 + $0x68] sm:$0xff]
      %v1142 = vld [vmem:[%s4 + $0x70] sm:$0xff]
      %v1143 = vld [vmem:[%s4 + $0x78] sm:$0xff]
      %v1144 = vld [vmem:[%s5] sm:$0xff]
      %v1145 = vld [vmem:[%s5 + $0x8] sm:$0xff]
      %v1146 = vld [vmem:[%s5 + $0x10] sm:$0xff]
      %v1147 = vld [vmem:[%s5 + $0x18] sm:$0xff]
      %v1148 = vld [vmem:[%s5 + $0x20] sm:$0xff]
      %v1149 = vld [vmem:[%s5 + $0x28] sm:$0xff]
      %v1150 = vld [vmem:[%s5 + $0x30] sm:$0xff]
      %v1151 = vld [vmem:[%s5 + $0x38] sm:$0xff]
      %v1152 = vld [vmem:[%s5 + $0x40] sm:$0xff]
      %v1153 = vld [vmem:[%s5 + $0x48] sm:$0xff]
      %v1154 = vld [vmem:[%s5 + $0x50] sm:$0xff]
      %v1155 = vld [vmem:[%s5 + $0x58] sm:$0xff]
      %v1156 = vld [vmem:[%s5 + $0x60] sm:$0xff]
      %v1157 = vld [vmem:[%s5 + $0x68] sm:$0xff]
      %v1158 = vld [vmem:[%s5 + $0x70] sm:$0xff]
      %v1159 = vld [vmem:[%s5 + $0x78] sm:$0xff]
      %1161 = vset.pattern.permute.xlu0 0
      %1162 = vperm.xlu0 %1161, %v1144
      %v1163 = vpop.permute.xlu0 %1162
      %1166 = vset.pattern.permute.xlu0 0
      %1167 = vperm.xlu0 %1166, %v1145
      %v1168 = vpop.permute.xlu0 %1167
      %1171 = vset.pattern.permute.xlu0 0
      %1172 = vperm.xlu0 %1171, %v1146
      %v1173 = vpop.permute.xlu0 %1172
      %1176 = vset.pattern.permute.xlu0 0
      %1177 = vperm.xlu0 %1176, %v1147
      %v1178 = vpop.permute.xlu0 %1177
      %1181 = vset.pattern.permute.xlu0 0
      %1182 = vperm.xlu0 %1181, %v1148
      %v1183 = vpop.permute.xlu0 %1182
      %1186 = vset.pattern.permute.xlu0 0
      %1187 = vperm.xlu0 %1186, %v1149
      %v1188 = vpop.permute.xlu0 %1187
      %1191 = vset.pattern.permute.xlu0 0
      %1192 = vperm.xlu0 %1191, %v1150
      %v1193 = vpop.permute.xlu0 %1192
      %1196 = vset.pattern.permute.xlu0 0
      %1197 = vperm.xlu0 %1196, %v1151
      %v1198 = vpop.permute.xlu0 %1197
      %1201 = vset.pattern.permute.xlu0 0
      %1202 = vperm.xlu0 %1201, %v1152
      %v1203 = vpop.permute.xlu0 %1202
      %1206 = vset.pattern.permute.xlu0 0
      %1207 = vperm.xlu0 %1206, %v1153
      %v1208 = vpop.permute.xlu0 %1207
      %1211 = vset.pattern.permute.xlu0 0
      %1212 = vperm.xlu0 %1211, %v1154
      %v1213 = vpop.permute.xlu0 %1212
      %1216 = vset.pattern.permute.xlu0 0
      %1217 = vperm.xlu0 %1216, %v1155
      %v1218 = vpop.permute.xlu0 %1217
      %1221 = vset.pattern.permute.xlu0 0
      %1222 = vperm.xlu0 %1221, %v1156
      %v1223 = vpop.permute.xlu0 %1222
      %1226 = vset.pattern.permute.xlu0 0
      %1227 = vperm.xlu0 %1226, %v1157
      %v1228 = vpop.permute.xlu0 %1227
      %1231 = vset.pattern.permute.xlu0 0
      %1232 = vperm.xlu0 %1231, %v1158
      %v1233 = vpop.permute.xlu0 %1232
      %1236 = vset.pattern.permute.xlu0 0
      %1237 = vperm.xlu0 %1236, %v1159
      %v1238 = vpop.permute.xlu0 %1237
      %v1256 = vunpack.c.l.b16 %v1128
      %v1257 = vunpack.c.h.b16 %v1128
      %v1258 = vunpack.c.l.b16 %v1129
      %v1259 = vunpack.c.h.b16 %v1129
      %v1260 = vunpack.c.l.b16 %v1130
      %v1261 = vunpack.c.h.b16 %v1130
      %v1262 = vunpack.c.l.b16 %v1131
      %v1263 = vunpack.c.h.b16 %v1131
      %v1264 = vunpack.c.l.b16 %v1132
      %v1265 = vunpack.c.h.b16 %v1132
      %v1266 = vunpack.c.l.b16 %v1133
      %v1267 = vunpack.c.h.b16 %v1133
      %v1268 = vunpack.c.l.b16 %v1134
      %v1269 = vunpack.c.h.b16 %v1134
      %v1270 = vunpack.c.l.b16 %v1135
      %v1271 = vunpack.c.h.b16 %v1135
      %v1272 = vunpack.c.l.b16 %v1136
      %v1273 = vunpack.c.h.b16 %v1136
      %v1274 = vunpack.c.l.b16 %v1137
      %v1275 = vunpack.c.h.b16 %v1137
      %v1276 = vunpack.c.l.b16 %v1138
      %v1277 = vunpack.c.h.b16 %v1138
      %v1278 = vunpack.c.l.b16 %v1139
      %v1279 = vunpack.c.h.b16 %v1139
      %v1280 = vunpack.c.l.b16 %v1140
      %v1281 = vunpack.c.h.b16 %v1140
      %v1282 = vunpack.c.l.b16 %v1141
      %v1283 = vunpack.c.h.b16 %v1141
      %v1284 = vunpack.c.l.b16 %v1142
      %v1285 = vunpack.c.h.b16 %v1142
      %v1286 = vunpack.c.l.b16 %v1143
      %v1287 = vunpack.c.h.b16 %v1143
      %v1288 = vpack.c.b16 %v1258, %v1256
      %v1289 = vpack.c.b16 %v1259, %v1257
      %v1290 = vpack.c.b16 %v1262, %v1260
      %v1291 = vpack.c.b16 %v1263, %v1261
      %v1292 = vpack.c.b16 %v1266, %v1264
      %v1293 = vpack.c.b16 %v1267, %v1265
      %v1294 = vpack.c.b16 %v1270, %v1268
      %v1295 = vpack.c.b16 %v1271, %v1269
      %v1296 = vpack.c.b16 %v1274, %v1272
      %v1297 = vpack.c.b16 %v1275, %v1273
      %v1298 = vpack.c.b16 %v1278, %v1276
      %v1299 = vpack.c.b16 %v1279, %v1277
      %v1300 = vpack.c.b16 %v1282, %v1280
      %v1301 = vpack.c.b16 %v1283, %v1281
      %v1302 = vpack.c.b16 %v1286, %v1284
      %v1303 = vpack.c.b16 %v1287, %v1285
      %1320 = vmatprep.subr.bf16.mxu0 %v392
      %1321 = vmatpush1.bf16.msra.mxu0 %v391
      %1322 = vmatprep.subr.bf16.mxu0 %v394
      %1323 = vmatpush1.bf16.msra.mxu0 %v393
      %1324 = vmatprep.subr.bf16.mxu0 %v396
      %1325 = vmatpush1.bf16.msra.mxu0 %v395
      %1326 = vmatprep.subr.bf16.mxu0 %v398
      %1327 = vmatpush1.bf16.msra.mxu0 %v397
      %1328 = vmatprep.subr.bf16.mxu0 %v400
      %1329 = vmatpush1.bf16.msra.mxu0 %v399
      %1330 = vmatprep.subr.bf16.mxu0 %v402
      %1331 = vmatpush1.bf16.msra.mxu0 %v401
      %1332 = vmatprep.subr.bf16.mxu0 %v404
      %1333 = vmatpush1.bf16.msra.mxu0 %v403
      %1334 = vmatprep.subr.bf16.mxu0 %v406
      %1335 = vmatpush1.bf16.msra.mxu0 %v405
      %1336 = vmatprep.subr.bf16.mxu0 %v408
      %1337 = vmatpush1.bf16.msra.mxu0 %v407
      %1338 = vmatprep.subr.bf16.mxu0 %v410
      %1339 = vmatpush1.bf16.msra.mxu0 %v409
      %1340 = vmatprep.subr.bf16.mxu0 %v412
      %1341 = vmatpush1.bf16.msra.mxu0 %v411
      %1342 = vmatprep.subr.bf16.mxu0 %v414
      %1343 = vmatpush1.bf16.msra.mxu0 %v413
      %1344 = vmatprep.subr.bf16.mxu0 %v416
      %1345 = vmatpush1.bf16.msra.mxu0 %v415
      %1346 = vmatprep.subr.bf16.mxu0 %v418
      %1347 = vmatpush1.bf16.msra.mxu0 %v417
      %1348 = vmatprep.subr.bf16.mxu0 %v420
      %1349 = vmatpush1.bf16.msra.mxu0 %v419
      %1350 = vmatprep.subr.bf16.mxu0 %v422
      %1351 = vmatpush1.bf16.msra.mxu0 %v421
      %1352 = vmatprep.mubr.bf16.mxu0 %v1289
      %1353 = vmatmul.mubr.bf16.gmra.mrb[0].mxu0 %v1288
      %v1354 = vpop.f32.mrb[0].mxu0
      %v1355 = vadd.f32 %v1163, %v1354
      %v1356 = vpop.f32.mrb[0].mxu0
      %v1357 = vadd.f32 %v1163, %v1356
      %v1358 = vpop.f32.mrb[0].mxu0
      %v1359 = vadd.f32 %v1168, %v1358
      %v1360 = vpop.f32.mrb[0].mxu0
      %v1361 = vadd.f32 %v1168, %v1360
      %1362 = vmatprep.mubr.bf16.mxu0 %v1291
      %1363 = vmatmul.mubr.bf16.gmra.mrb[0].mxu0 %v1290
      %v1364 = vpop.f32.mrb[0].mxu0
      %v1365 = vadd.f32 %v1173, %v1364
      %v1366 = vpop.f32.mrb[0].mxu0
      %v1367 = vadd.f32 %v1173, %v1366
      %v1368 = vpop.f32.mrb[0].mxu0
      %v1369 = vadd.f32 %v1178, %v1368
      %v1370 = vpop.f32.mrb[0].mxu0
      %v1371 = vadd.f32 %v1178, %v1370
      %1372 = vmatprep.mubr.bf16.mxu0 %v1293
      %1373 = vmatmul.mubr.bf16.gmra.mrb[0].mxu0 %v1292
      %v1374 = vpop.f32.mrb[0].mxu0
      %v1375 = vadd.f32 %v1183, %v1374
      %v1376 = vpop.f32.mrb[0].mxu0
      %v1377 = vadd.f32 %v1183, %v1376
      %v1378 = vpop.f32.mrb[0].mxu0
      %v1379 = vadd.f32 %v1188, %v1378
      %v1380 = vpop.f32.mrb[0].mxu0
      %v1381 = vadd.f32 %v1188, %v1380
      %1382 = vmatprep.mubr.bf16.mxu0 %v1295
      %1383 = vmatmul.mubr.bf16.gmra.mrb[0].mxu0 %v1294
      %v1384 = vpop.f32.mrb[0].mxu0
      %v1385 = vadd.f32 %v1193, %v1384
      %v1386 = vpop.f32.mrb[0].mxu0
      %v1387 = vadd.f32 %v1193, %v1386
      %v1388 = vpop.f32.mrb[0].mxu0
      %v1389 = vadd.f32 %v1198, %v1388
      %v1390 = vpop.f32.mrb[0].mxu0
      %v1391 = vadd.f32 %v1198, %v1390
      %1392 = vmatprep.mubr.bf16.mxu0 %v1297
      %1393 = vmatmul.mubr.bf16.gmra.mrb[0].mxu0 %v1296
      %v1394 = vpop.f32.mrb[0].mxu0
      %v1395 = vadd.f32 %v1203, %v1394
      %v1396 = vpop.f32.mrb[0].mxu0
      %v1397 = vadd.f32 %v1203, %v1396
      %v1398 = vpop.f32.mrb[0].mxu0
      %v1399 = vadd.f32 %v1208, %v1398
      %v1400 = vpop.f32.mrb[0].mxu0
      %v1401 = vadd.f32 %v1208, %v1400
      %1402 = vmatprep.mubr.bf16.mxu0 %v1299
      %1403 = vmatmul.mubr.bf16.gmra.mrb[0].mxu0 %v1298
      %v1404 = vpop.f32.mrb[0].mxu0
      %v1405 = vadd.f32 %v1213, %v1404
      %v1406 = vpop.f32.mrb[0].mxu0
      %v1407 = vadd.f32 %v1213, %v1406
      %v1408 = vpop.f32.mrb[0].mxu0
      %v1409 = vadd.f32 %v1218, %v1408
      %v1410 = vpop.f32.mrb[0].mxu0
      %v1411 = vadd.f32 %v1218, %v1410
      %1412 = vmatprep.mubr.bf16.mxu0 %v1301
      %1413 = vmatmul.mubr.bf16.gmra.mrb[0].mxu0 %v1300
      %v1414 = vpop.f32.mrb[0].mxu0
      %v1415 = vadd.f32 %v1223, %v1414
      %v1416 = vpop.f32.mrb[0].mxu0
      %v1417 = vadd.f32 %v1223, %v1416
      %v1418 = vpop.f32.mrb[0].mxu0
      %v1419 = vadd.f32 %v1228, %v1418
      %v1420 = vpop.f32.mrb[0].mxu0
      %v1421 = vadd.f32 %v1228, %v1420
      %1422 = vmatprep.mubr.bf16.mxu0 %v1303
      %1423 = vmatmul.mubr.bf16.gmra.mrb[0].mxu0 %v1302
      %v1424 = vpop.f32.mrb[0].mxu0
      %v1425 = vadd.f32 %v1233, %v1424
      %v1426 = vpop.f32.mrb[0].mxu0
      %v1427 = vadd.f32 %v1233, %v1426
      %v1428 = vpop.f32.mrb[0].mxu0
      %v1429 = vadd.f32 %v1238, %v1428
      %v1430 = vpop.f32.mrb[0].mxu0
      %v1431 = vadd.f32 %v1238, %v1430
      %1432 = vdwg.mxu0
      %1433 = vxpose.xlu0.b32.start [1/16] %v1355, 128
      %1434 = vxpose.xlu0.b32.cont [2/16] %v1359, 128
      %1435 = vxpose.xlu0.b32.cont [3/16] %v1365, 128
      %1436 = vxpose.xlu0.b32.cont [4/16] %v1369, 128
      %1437 = vxpose.xlu0.b32.cont [5/16] %v1375, 128
      %1438 = vxpose.xlu0.b32.cont [6/16] %v1379, 128
      %1439 = vxpose.xlu0.b32.cont [7/16] %v1385, 128
      %1440 = vxpose.xlu0.b32.cont [8/16] %v1389, 128
      %1441 = vxpose.xlu0.b32.cont [9/16] %v1395, 128
      %1442 = vxpose.xlu0.b32.cont [10/16] %v1399, 128
      %1443 = vxpose.xlu0.b32.cont [11/16] %v1405, 128
      %1444 = vxpose.xlu0.b32.cont [12/16] %v1409, 128
      %1445 = vxpose.xlu0.b32.cont [13/16] %v1415, 128
      %1446 = vxpose.xlu0.b32.cont [14/16] %v1419, 128
      %1447 = vxpose.xlu0.b32.cont [15/16] %v1425, 128
      %1448 = vxpose.xlu0.b32.end [16/16] %v1429, 128
      %v1449 = vpop.trf.xlu0
      %v1450 = vpop.trf.xlu0
      %v1451 = vpop.trf.xlu0
      %v1452 = vpop.trf.xlu0
      %v1453 = vpop.trf.xlu0
      %v1454 = vpop.trf.xlu0
      %v1455 = vpop.trf.xlu0
      %v1456 = vpop.trf.xlu0
      %v1457 = vpop.trf.xlu0
      %v1458 = vpop.trf.xlu0
      %v1459 = vpop.trf.xlu0
      %v1460 = vpop.trf.xlu0
      %v1461 = vpop.trf.xlu0
      %v1462 = vpop.trf.xlu0
      %v1463 = vpop.trf.xlu0
      %v1464 = vpop.trf.xlu0
      %1465 = vxpose.xlu0.b32.start [1/16] %v1357, 128
      %1466 = vxpose.xlu0.b32.cont [2/16] %v1361, 128
      %1467 = vxpose.xlu0.b32.cont [3/16] %v1367, 128
      %1468 = vxpose.xlu0.b32.cont [4/16] %v1371, 128
      %1469 = vxpose.xlu0.b32.cont [5/16] %v1377, 128
      %1470 = vxpose.xlu0.b32.cont [6/16] %v1381, 128
      %1471 = vxpose.xlu0.b32.cont [7/16] %v1387, 128
      %1472 = vxpose.xlu0.b32.cont [8/16] %v1391, 128
      %1473 = vxpose.xlu0.b32.cont [9/16] %v1397, 128
      %1474 = vxpose.xlu0.b32.cont [10/16] %v1401, 128
      %1475 = vxpose.xlu0.b32.cont [11/16] %v1407, 128
      %1476 = vxpose.xlu0.b32.cont [12/16] %v1411, 128
      %1477 = vxpose.xlu0.b32.cont [13/16] %v1417, 128
      %1478 = vxpose.xlu0.b32.cont [14/16] %v1421, 128
      %1479 = vxpose.xlu0.b32.cont [15/16] %v1427, 128
      %1480 = vxpose.xlu0.b32.end [16/16] %v1431, 128
      %v1481 = vpop.trf.xlu0
      %v1482 = vpop.trf.xlu0
      %v1483 = vpop.trf.xlu0
      %v1484 = vpop.trf.xlu0
      %v1485 = vpop.trf.xlu0
      %v1486 = vpop.trf.xlu0
      %v1487 = vpop.trf.xlu0
      %v1488 = vpop.trf.xlu0
      %v1489 = vpop.trf.xlu0
      %v1490 = vpop.trf.xlu0
      %v1491 = vpop.trf.xlu0
      %v1492 = vpop.trf.xlu0
      %v1493 = vpop.trf.xlu0
      %v1494 = vpop.trf.xlu0
      %v1495 = vpop.trf.xlu0
      %v1496 = vpop.trf.xlu0
      %v1497 = vpack.c.bf16 %v1450, %v1449
      %v1498 = vpack.c.bf16 %v1452, %v1451
      %v1499 = vpack.c.bf16 %v1454, %v1453
      %v1500 = vpack.c.bf16 %v1456, %v1455
      %v1501 = vpack.c.bf16 %v1458, %v1457
      %v1502 = vpack.c.bf16 %v1460, %v1459
      %v1503 = vpack.c.bf16 %v1462, %v1461
      %v1504 = vpack.c.bf16 %v1464, %v1463
      %v1505 = vpack.c.bf16 %v1482, %v1481
      %v1506 = vpack.c.bf16 %v1484, %v1483
      %v1507 = vpack.c.bf16 %v1486, %v1485
      %v1508 = vpack.c.bf16 %v1488, %v1487
      %v1509 = vpack.c.bf16 %v1490, %v1489
      %v1510 = vpack.c.bf16 %v1492, %v1491
      %v1511 = vpack.c.bf16 %v1494, %v1493
      %v1512 = vpack.c.bf16 %v1496, %v1495
      %1513 = vmatprep.subr.bf16.mxu0 0
      %1514 = vmatpush1.bf16.msra.mxu0 %v1113
      %1515 = vmatprep.subr.bf16.mxu0 0
      %1516 = vmatpush1.bf16.msra.mxu0 %v1115
      %1517 = vmatprep.subr.bf16.mxu0 0
      %1518 = vmatpush1.bf16.msra.mxu0 %v1117
      %1519 = vmatprep.subr.bf16.mxu0 0
      %1520 = vmatpush1.bf16.msra.mxu0 %v1119
      %1521 = vmatprep.subr.bf16.mxu0 0
      %1522 = vmatpush1.bf16.msra.mxu0 %v1121
      %1523 = vmatprep.subr.bf16.mxu0 0
      %1524 = vmatpush1.bf16.msra.mxu0 %v1123
      %1525 = vmatprep.subr.bf16.mxu0 0
      %1526 = vmatpush1.bf16.msra.mxu0 %v1125
      %1527 = vmatprep.subr.bf16.mxu0 0
      %1528 = vmatpush1.bf16.msra.mxu0 %v1127
      %1529 = vmatprep.subr.bf16.mxu0 0
      %1530 = vmatpush1.bf16.msra.mxu0 0
      %1531 = vmatprep.subr.bf16.mxu0 0
      %1532 = vmatpush1.bf16.msra.mxu0 0
      %1533 = vmatprep.subr.bf16.mxu0 0
      %1534 = vmatpush1.bf16.msra.mxu0 0
      %1535 = vmatprep.subr.bf16.mxu0 0
      %1536 = vmatpush1.bf16.msra.mxu0 0
      %1537 = vmatprep.subr.bf16.mxu0 0
      %1538 = vmatpush1.bf16.msra.mxu0 0
      %1539 = vmatprep.subr.bf16.mxu0 0
      %1540 = vmatpush1.bf16.msra.mxu0 0
      %1541 = vmatprep.subr.bf16.mxu0 0
      %1542 = vmatpush1.bf16.msra.mxu0 0
      %1543 = vmatprep.subr.bf16.mxu0 0
      %1544 = vmatpush1.bf16.msra.mxu0 0
      %1545 = vmatprep.mubr.bf16.mxu0 0
      %1546 = vmatmul.mubr.bf16.gmra.mrb[0].mxu0 %v1505
      %v1547 = vpop.f32.mrb[0].mxu0
      %v1548 = vadd.f32 0.0, %v1547
      %v1549 = vpop.f32.mrb[0].mxu0
      %v1550 = vpop.f32.mrb[0].mxu0
      %v1551 = vadd.f32 0.0, %v1550
      %v1552 = vpop.f32.mrb[0].mxu0
      %1553 = vmatprep.mubr.bf16.mxu0 0
      %1554 = vmatmul.mubr.bf16.gmra.mrb[0].mxu0 %v1506
      %v1555 = vpop.f32.mrb[0].mxu0
      %v1556 = vadd.f32 0.0, %v1555
      %v1557 = vpop.f32.mrb[0].mxu0
      %v1558 = vpop.f32.mrb[0].mxu0
      %v1559 = vadd.f32 0.0, %v1558
      %v1560 = vpop.f32.mrb[0].mxu0
      %1561 = vmatprep.mubr.bf16.mxu0 0
      %1562 = vmatmul.mubr.bf16.gmra.mrb[0].mxu0 %v1507
      %v1563 = vpop.f32.mrb[0].mxu0
      %v1564 = vadd.f32 0.0, %v1563
      %v1565 = vpop.f32.mrb[0].mxu0
      %v1566 = vpop.f32.mrb[0].mxu0
      %v1567 = vadd.f32 0.0, %v1566
      %v1568 = vpop.f32.mrb[0].mxu0
      %1569 = vmatprep.mubr.bf16.mxu0 0
      %1570 = vmatmul.mubr.bf16.gmra.mrb[0].mxu0 %v1508
      %v1571 = vpop.f32.mrb[0].mxu0
      %v1572 = vadd.f32 0.0, %v1571
      %v1573 = vpop.f32.mrb[0].mxu0
      %v1574 = vpop.f32.mrb[0].mxu0
      %v1575 = vadd.f32 0.0, %v1574
      %v1576 = vpop.f32.mrb[0].mxu0
      %1577 = vmatprep.mubr.bf16.mxu0 0
      %1578 = vmatmul.mubr.bf16.gmra.mrb[0].mxu0 %v1509
      %v1579 = vpop.f32.mrb[0].mxu0
      %v1580 = vadd.f32 0.0, %v1579
      %v1581 = vpop.f32.mrb[0].mxu0
      %v1582 = vpop.f32.mrb[0].mxu0
      %v1583 = vadd.f32 0.0, %v1582
      %v1584 = vpop.f32.mrb[0].mxu0
      %1585 = vmatprep.mubr.bf16.mxu0 0
      %1586 = vmatmul.mubr.bf16.gmra.mrb[0].mxu0 %v1510
      %v1587 = vpop.f32.mrb[0].mxu0
      %v1588 = vadd.f32 0.0, %v1587
      %v1589 = vpop.f32.mrb[0].mxu0
      %v1590 = vpop.f32.mrb[0].mxu0
      %v1591 = vadd.f32 0.0, %v1590
      %v1592 = vpop.f32.mrb[0].mxu0
      %1593 = vmatprep.mubr.bf16.mxu0 0
      %1594 = vmatmul.mubr.bf16.gmra.mrb[0].mxu0 %v1511
      %v1595 = vpop.f32.mrb[0].mxu0
      %v1596 = vadd.f32 0.0, %v1595
      %v1597 = vpop.f32.mrb[0].mxu0
      %v1598 = vpop.f32.mrb[0].mxu0
      %v1599 = vadd.f32 0.0, %v1598
      %v1600 = vpop.f32.mrb[0].mxu0
      %1601 = vmatprep.mubr.bf16.mxu0 0
      %1602 = vmatmul.mubr.bf16.gmra.mrb[0].mxu0 %v1512
      %v1603 = vpop.f32.mrb[0].mxu0
      %v1604 = vadd.f32 0.0, %v1603
      %v1605 = vpop.f32.mrb[0].mxu0
      %v1606 = vpop.f32.mrb[0].mxu0
      %v1607 = vadd.f32 0.0, %v1606
      %v1608 = vpop.f32.mrb[0].mxu0
      %1609 = vdwg.mxu0
      %1610 = vmatprep.subr.bf16.mxu0 0
      %1611 = vmatpush1.bf16.msra.mxu0 %v1112
      %1612 = vmatprep.subr.bf16.mxu0 0
      %1613 = vmatpush1.bf16.msra.mxu0 %v1114
      %1614 = vmatprep.subr.bf16.mxu0 0
      %1615 = vmatpush1.bf16.msra.mxu0 %v1116
      %1616 = vmatprep.subr.bf16.mxu0 0
      %1617 = vmatpush1.bf16.msra.mxu0 %v1118
      %1618 = vmatprep.subr.bf16.mxu0 0
      %1619 = vmatpush1.bf16.msra.mxu0 %v1120
      %1620 = vmatprep.subr.bf16.mxu0 0
      %1621 = vmatpush1.bf16.msra.mxu0 %v1122
      %1622 = vmatprep.subr.bf16.mxu0 0
      %1623 = vmatpush1.bf16.msra.mxu0 %v1124
      %1624 = vmatprep.subr.bf16.mxu0 0
      %1625 = vmatpush1.bf16.msra.mxu0 %v1126
      %1626 = vmatprep.subr.bf16.mxu0 0
      %1627 = vmatpush1.bf16.msra.mxu0 0
      %1628 = vmatprep.subr.bf16.mxu0 0
      %1629 = vmatpush1.bf16.msra.mxu0 0
      %1630 = vmatprep.subr.bf16.mxu0 0
      %1631 = vmatpush1.bf16.msra.mxu0 0
      %1632 = vmatprep.subr.bf16.mxu0 0
      %1633 = vmatpush1.bf16.msra.mxu0 0
      %1634 = vmatprep.subr.bf16.mxu0 0
      %1635 = vmatpush1.bf16.msra.mxu0 0
      %1636 = vmatprep.subr.bf16.mxu0 0
      %1637 = vmatpush1.bf16.msra.mxu0 0
      %1638 = vmatprep.subr.bf16.mxu0 0
      %1639 = vmatpush1.bf16.msra.mxu0 0
      %1640 = vmatprep.subr.bf16.mxu0 0
      %1641 = vmatpush1.bf16.msra.mxu0 0
      %1642 = vmatprep.mubr.bf16.mxu0 0
      %1643 = vmatmul.mubr.bf16.gmra.mrb[0].mxu0 %v1497
      %v1644 = vpop.f32.mrb[0].mxu0
      %v1645 = vadd.f32 %v1548, %v1644
      %v1646 = vpop.f32.mrb[0].mxu0
      %v1647 = vpop.f32.mrb[0].mxu0
      %v1648 = vadd.f32 %v1551, %v1647
      %v1649 = vpop.f32.mrb[0].mxu0
      %1650 = vmatprep.mubr.bf16.mxu0 0
      %1651 = vmatmul.mubr.bf16.gmra.mrb[0].mxu0 %v1498
      %v1652 = vpop.f32.mrb[0].mxu0
      %v1653 = vadd.f32 %v1556, %v1652
      %v1654 = vpop.f32.mrb[0].mxu0
      %v1655 = vpop.f32.mrb[0].mxu0
      %v1656 = vadd.f32 %v1559, %v1655
      %v1657 = vpop.f32.mrb[0].mxu0
      %1658 = vmatprep.mubr.bf16.mxu0 0
      %1659 = vmatmul.mubr.bf16.gmra.mrb[0].mxu0 %v1499
      %v1660 = vpop.f32.mrb[0].mxu0
      %v1661 = vadd.f32 %v1564, %v1660
      %v1662 = vpop.f32.mrb[0].mxu0
      %v1663 = vpop.f32.mrb[0].mxu0
      %v1664 = vadd.f32 %v1567, %v1663
      %v1665 = vpop.f32.mrb[0].mxu0
      %1666 = vmatprep.mubr.bf16.mxu0 0
      %1667 = vmatmul.mubr.bf16.gmra.mrb[0].mxu0 %v1500
      %v1668 = vpop.f32.mrb[0].mxu0
      %v1669 = vadd.f32 %v1572, %v1668
      %v1670 = vpop.f32.mrb[0].mxu0
      %v1671 = vpop.f32.mrb[0].mxu0
      %v1672 = vadd.f32 %v1575, %v1671
      %v1673 = vpop.f32.mrb[0].mxu0
      %1674 = vmatprep.mubr.bf16.mxu0 0
      %1675 = vmatmul.mubr.bf16.gmra.mrb[0].mxu0 %v1501
      %v1676 = vpop.f32.mrb[0].mxu0
      %v1677 = vadd.f32 %v1580, %v1676
      %v1678 = vpop.f32.mrb[0].mxu0
      %v1679 = vpop.f32.mrb[0].mxu0
      %v1680 = vadd.f32 %v1583, %v1679
      %v1681 = vpop.f32.mrb[0].mxu0
      %1682 = vmatprep.mubr.bf16.mxu0 0
      %1683 = vmatmul.mubr.bf16.gmra.mrb[0].mxu0 %v1502
      %v1684 = vpop.f32.mrb[0].mxu0
      %v1685 = vadd.f32 %v1588, %v1684
      %v1686 = vpop.f32.mrb[0].mxu0
      %v1687 = vpop.f32.mrb[0].mxu0
      %v1688 = vadd.f32 %v1591, %v1687
      %v1689 = vpop.f32.mrb[0].mxu0
      %1690 = vmatprep.mubr.bf16.mxu0 0
      %1691 = vmatmul.mubr.bf16.gmra.mrb[0].mxu0 %v1503
      %v1692 = vpop.f32.mrb[0].mxu0
      %v1693 = vadd.f32 %v1596, %v1692
      %v1694 = vpop.f32.mrb[0].mxu0
      %v1695 = vpop.f32.mrb[0].mxu0
      %v1696 = vadd.f32 %v1599, %v1695
      %v1697 = vpop.f32.mrb[0].mxu0
      %1698 = vmatprep.mubr.bf16.mxu0 0
      %1699 = vmatmul.mubr.bf16.gmra.mrb[0].mxu0 %v1504
      %v1700 = vpop.f32.mrb[0].mxu0
      %v1701 = vadd.f32 %v1604, %v1700
      %v1702 = vpop.f32.mrb[0].mxu0
      %v1703 = vpop.f32.mrb[0].mxu0
      %v1704 = vadd.f32 %v1607, %v1703
      %v1705 = vpop.f32.mrb[0].mxu0
      %1706 = vdwg.mxu0
      %v1707 = vmul.f32 %v1645, 0.0078125
      %v1708 = vmul.f32 %v1648, 0.0078125
      %v1709 = vmul.f32 %v1653, 0.0078125
      %v1710 = vmul.f32 %v1656, 0.0078125
      %v1711 = vmul.f32 %v1661, 0.0078125
      %v1712 = vmul.f32 %v1664, 0.0078125
      %v1713 = vmul.f32 %v1669, 0.0078125
      %v1714 = vmul.f32 %v1672, 0.0078125
      %v1715 = vmul.f32 %v1677, 0.0078125
      %v1716 = vmul.f32 %v1680, 0.0078125
      %v1717 = vmul.f32 %v1685, 0.0078125
      %v1718 = vmul.f32 %v1688, 0.0078125
      %v1719 = vmul.f32 %v1693, 0.0078125
      %v1720 = vmul.f32 %v1696, 0.0078125
      %v1721 = vmul.f32 %v1701, 0.0078125
      %v1722 = vmul.f32 %v1704, 0.0078125
      %v1723 = vpack.c.bf16 %v1708, %v1707
      %v1724 = vpack.c.bf16 %v1710, %v1709
      %v1725 = vpack.c.bf16 %v1712, %v1711
      %v1726 = vpack.c.bf16 %v1714, %v1713
      %v1727 = vpack.c.bf16 %v1716, %v1715
      %v1728 = vpack.c.bf16 %v1718, %v1717
      %v1729 = vpack.c.bf16 %v1720, %v1719
      %v1730 = vpack.c.bf16 %v1722, %v1721
      %1731 = vmatprep.subr.bf16.mxu0 0
      %1732 = vmatpush1.bf16.xpose.msra.mxu0 %v1723
      %1733 = vmatprep.subr.bf16.mxu0 0
      %1734 = vmatpush1.bf16.xpose.msra.mxu0 %v1724
      %1735 = vmatprep.subr.bf16.mxu0 0
      %1736 = vmatpush1.bf16.xpose.msra.mxu0 %v1725
      %1737 = vmatprep.subr.bf16.mxu0 0
      %1738 = vmatpush1.bf16.xpose.msra.mxu0 %v1726
      %1739 = vmatprep.subr.bf16.mxu0 0
      %1740 = vmatpush1.bf16.xpose.msra.mxu0 %v1727
      %1741 = vmatprep.subr.bf16.mxu0 0
      %1742 = vmatpush1.bf16.xpose.msra.mxu0 %v1728
      %1743 = vmatprep.subr.bf16.mxu0 0
      %1744 = vmatpush1.bf16.xpose.msra.mxu0 %v1729
      %1745 = vmatprep.subr.bf16.mxu0 0
      %1746 = vmatpush1.bf16.xpose.msra.mxu0 %v1730
      %1747 = vmatprep.subr.bf16.mxu0 0
      %1748 = vmatpush1.bf16.xpose.msra.mxu0 0
      %1749 = vmatprep.subr.bf16.mxu0 0
      %1750 = vmatpush1.bf16.xpose.msra.mxu0 0
      %1751 = vmatprep.subr.bf16.mxu0 0
      %1752 = vmatpush1.bf16.xpose.msra.mxu0 0
      %1753 = vmatprep.subr.bf16.mxu0 0
      %1754 = vmatpush1.bf16.xpose.msra.mxu0 0
      %1755 = vmatprep.subr.bf16.mxu0 0
      %1756 = vmatpush1.bf16.xpose.msra.mxu0 0
      %1757 = vmatprep.subr.bf16.mxu0 0
      %1758 = vmatpush1.bf16.xpose.msra.mxu0 0
      %1759 = vmatprep.subr.bf16.mxu0 0
      %1760 = vmatpush1.bf16.xpose.msra.mxu0 0
      %1761 = vmatprep.subr.bf16.mxu0 0
      %1762 = vmatpush1.bf16.xpose.msra.mxu0 0
      %1763 = vmatprep.mubr.bf16.mxu0 0
      %1764 = vmatmul.mubr.bf16.gmra.mrb[0].mxu0 %v1096
      %v1765 = vpop.f32.mrb[0].mxu0
      %v1766 = vadd.f32 0.0, %v1765
      %v1767 = vpop.f32.mrb[0].mxu0
      %v1768 = vpop.f32.mrb[0].mxu0
      %v1769 = vadd.f32 0.0, %v1768
      %v1770 = vpop.f32.mrb[0].mxu0
      %1771 = vmatprep.mubr.bf16.mxu0 0
      %1772 = vmatmul.mubr.bf16.gmra.mrb[0].mxu0 %v1098
      %v1773 = vpop.f32.mrb[0].mxu0
      %v1774 = vadd.f32 0.0, %v1773
      %v1775 = vpop.f32.mrb[0].mxu0
      %v1776 = vpop.f32.mrb[0].mxu0
      %v1777 = vadd.f32 0.0, %v1776
      %v1778 = vpop.f32.mrb[0].mxu0
      %1779 = vmatprep.mubr.bf16.mxu0 0
      %1780 = vmatmul.mubr.bf16.gmra.mrb[0].mxu0 %v1100
      %v1781 = vpop.f32.mrb[0].mxu0
      %v1782 = vadd.f32 0.0, %v1781
      %v1783 = vpop.f32.mrb[0].mxu0
      %v1784 = vpop.f32.mrb[0].mxu0
      %v1785 = vadd.f32 0.0, %v1784
      %v1786 = vpop.f32.mrb[0].mxu0
      %1787 = vmatprep.mubr.bf16.mxu0 0
      %1788 = vmatmul.mubr.bf16.gmra.mrb[0].mxu0 %v1102
      %v1789 = vpop.f32.mrb[0].mxu0
      %v1790 = vadd.f32 0.0, %v1789
      %v1791 = vpop.f32.mrb[0].mxu0
      %v1792 = vpop.f32.mrb[0].mxu0
      %v1793 = vadd.f32 0.0, %v1792
      %v1794 = vpop.f32.mrb[0].mxu0
      %1795 = vmatprep.mubr.bf16.mxu0 0
      %1796 = vmatmul.mubr.bf16.gmra.mrb[0].mxu0 %v1104
      %v1797 = vpop.f32.mrb[0].mxu0
      %v1798 = vadd.f32 0.0, %v1797
      %v1799 = vpop.f32.mrb[0].mxu0
      %v1800 = vpop.f32.mrb[0].mxu0
      %v1801 = vadd.f32 0.0, %v1800
      %v1802 = vpop.f32.mrb[0].mxu0
      %1803 = vmatprep.mubr.bf16.mxu0 0
      %1804 = vmatmul.mubr.bf16.gmra.mrb[0].mxu0 %v1106
      %v1805 = vpop.f32.mrb[0].mxu0
      %v1806 = vadd.f32 0.0, %v1805
      %v1807 = vpop.f32.mrb[0].mxu0
      %v1808 = vpop.f32.mrb[0].mxu0
      %v1809 = vadd.f32 0.0, %v1808
      %v1810 = vpop.f32.mrb[0].mxu0
      %1811 = vmatprep.mubr.bf16.mxu0 0
      %1812 = vmatmul.mubr.bf16.gmra.mrb[0].mxu0 %v1108
      %v1813 = vpop.f32.mrb[0].mxu0
      %v1814 = vadd.f32 0.0, %v1813
      %v1815 = vpop.f32.mrb[0].mxu0
      %v1816 = vpop.f32.mrb[0].mxu0
      %v1817 = vadd.f32 0.0, %v1816
      %v1818 = vpop.f32.mrb[0].mxu0
      %1819 = vmatprep.mubr.bf16.mxu0 0
      %1820 = vmatmul.mubr.bf16.gmra.mrb[0].mxu0 %v1110
      %v1821 = vpop.f32.mrb[0].mxu0
      %v1822 = vadd.f32 0.0, %v1821
      %v1823 = vpop.f32.mrb[0].mxu0
      %v1824 = vpop.f32.mrb[0].mxu0
      %v1825 = vadd.f32 0.0, %v1824
      %v1826 = vpop.f32.mrb[0].mxu0
      %1827 = vdwg.mxu0
      %v1828 = vpack.c.bf16 %v1769, %v1766
      %v1829 = vpack.c.bf16 %v1777, %v1774
      %v1830 = vpack.c.bf16 %v1785, %v1782
      %v1831 = vpack.c.bf16 %v1793, %v1790
      %v1832 = vpack.c.bf16 %v1801, %v1798
      %v1833 = vpack.c.bf16 %v1809, %v1806
      %v1834 = vpack.c.bf16 %v1817, %v1814
      %v1835 = vpack.c.bf16 %v1825, %v1822
      %1836 = vst [vmem:[#allocation2] sm:$0xff] %v1828
      %1837 = vst [vmem:[#allocation2 + $0x10] sm:$0xff] %v1829
      %1838 = vst [vmem:[#allocation2 + $0x20] sm:$0xff] %v1830
      %1839 = vst [vmem:[#allocation2 + $0x30] sm:$0xff] %v1831
      %1840 = vst [vmem:[#allocation2 + $0x40] sm:$0xff] %v1832
      %1841 = vst [vmem:[#allocation2 + $0x50] sm:$0xff] %v1833
      %1842 = vst [vmem:[#allocation2 + $0x60] sm:$0xff] %v1834
      %1843 = vst [vmem:[#allocation2 + $0x70] sm:$0xff] %v1835
      %1844 = vmatprep.subr.bf16.mxu0 0
      %1845 = vmatpush1.bf16.xpose.msra.mxu0 %v1723
      %1846 = vmatprep.subr.bf16.mxu0 0
      %1847 = vmatpush1.bf16.xpose.msra.mxu0 %v1724
      %1848 = vmatprep.subr.bf16.mxu0 0
      %1849 = vmatpush1.bf16.xpose.msra.mxu0 %v1725
      %1850 = vmatprep.subr.bf16.mxu0 0
      %1851 = vmatpush1.bf16.xpose.msra.mxu0 %v1726
      %1852 = vmatprep.subr.bf16.mxu0 0
      %1853 = vmatpush1.bf16.xpose.msra.mxu0 %v1727
      %1854 = vmatprep.subr.bf16.mxu0 0
      %1855 = vmatpush1.bf16.xpose.msra.mxu0 %v1728
      %1856 = vmatprep.subr.bf16.mxu0 0
      %1857 = vmatpush1.bf16.xpose.msra.mxu0 %v1729
      %1858 = vmatprep.subr.bf16.mxu0 0
      %1859 = vmatpush1.bf16.xpose.msra.mxu0 %v1730
      %1860 = vmatprep.subr.bf16.mxu0 0
      %1861 = vmatpush1.bf16.xpose.msra.mxu0 0
      %1862 = vmatprep.subr.bf16.mxu0 0
      %1863 = vmatpush1.bf16.xpose.msra.mxu0 0
      %1864 = vmatprep.subr.bf16.mxu0 0
      %1865 = vmatpush1.bf16.xpose.msra.mxu0 0
      %1866 = vmatprep.subr.bf16.mxu0 0
      %1867 = vmatpush1.bf16.xpose.msra.mxu0 0
      %1868 = vmatprep.subr.bf16.mxu0 0
      %1869 = vmatpush1.bf16.xpose.msra.mxu0 0
      %1870 = vmatprep.subr.bf16.mxu0 0
      %1871 = vmatpush1.bf16.xpose.msra.mxu0 0
      %1872 = vmatprep.subr.bf16.mxu0 0
      %1873 = vmatpush1.bf16.xpose.msra.mxu0 0
      %1874 = vmatprep.subr.bf16.mxu0 0
      %1875 = vmatpush1.bf16.xpose.msra.mxu0 0
      %1876 = vmatprep.mubr.bf16.mxu0 0
      %1877 = vmatmul.mubr.bf16.gmra.mrb[0].mxu0 %v1097
      %v1878 = vpop.f32.mrb[0].mxu0
      %v1879 = vadd.f32 0.0, %v1878
      %v1880 = vpop.f32.mrb[0].mxu0
      %v1881 = vpop.f32.mrb[0].mxu0
      %v1882 = vadd.f32 0.0, %v1881
      %v1883 = vpop.f32.mrb[0].mxu0
      %1884 = vmatprep.mubr.bf16.mxu0 0
      %1885 = vmatmul.mubr.bf16.gmra.mrb[0].mxu0 %v1099
      %v1886 = vpop.f32.mrb[0].mxu0
      %v1887 = vadd.f32 0.0, %v1886
      %v1888 = vpop.f32.mrb[0].mxu0
      %v1889 = vpop.f32.mrb[0].mxu0
      %v1890 = vadd.f32 0.0, %v1889
      %v1891 = vpop.f32.mrb[0].mxu0
      %1892 = vmatprep.mubr.bf16.mxu0 0
      %1893 = vmatmul.mubr.bf16.gmra.mrb[0].mxu0 %v1101
      %v1894 = vpop.f32.mrb[0].mxu0
      %v1895 = vadd.f32 0.0, %v1894
      %v1896 = vpop.f32.mrb[0].mxu0
      %v1897 = vpop.f32.mrb[0].mxu0
      %v1898 = vadd.f32 0.0, %v1897
      %v1899 = vpop.f32.mrb[0].mxu0
      %1900 = vmatprep.mubr.bf16.mxu0 0
      %1901 = vmatmul.mubr.bf16.gmra.mrb[0].mxu0 %v1103
      %v1902 = vpop.f32.mrb[0].mxu0
      %v1903 = vadd.f32 0.0, %v1902
      %v1904 = vpop.f32.mrb[0].mxu0
      %v1905 = vpop.f32.mrb[0].mxu0
      %v1906 = vadd.f32 0.0, %v1905
      %v1907 = vpop.f32.mrb[0].mxu0
      %1908 = vmatprep.mubr.bf16.mxu0 0
      %1909 = vmatmul.mubr.bf16.gmra.mrb[0].mxu0 %v1105
      %v1910 = vpop.f32.mrb[0].mxu0
      %v1911 = vadd.f32 0.0, %v1910
      %v1912 = vpop.f32.mrb[0].mxu0
      %v1913 = vpop.f32.mrb[0].mxu0
      %v1914 = vadd.f32 0.0, %v1913
      %v1915 = vpop.f32.mrb[0].mxu0
      %1916 = vmatprep.mubr.bf16.mxu0 0
      %1917 = vmatmul.mubr.bf16.gmra.mrb[0].mxu0 %v1107
      %v1918 = vpop.f32.mrb[0].mxu0
      %v1919 = vadd.f32 0.0, %v1918
      %v1920 = vpop.f32.mrb[0].mxu0
      %v1921 = vpop.f32.mrb[0].mxu0
      %v1922 = vadd.f32 0.0, %v1921
      %v1923 = vpop.f32.mrb[0].mxu0
      %1924 = vmatprep.mubr.bf16.mxu0 0
      %1925 = vmatmul.mubr.bf16.gmra.mrb[0].mxu0 %v1109
      %v1926 = vpop.f32.mrb[0].mxu0
      %v1927 = vadd.f32 0.0, %v1926
      %v1928 = vpop.f32.mrb[0].mxu0
      %v1929 = vpop.f32.mrb[0].mxu0
      %v1930 = vadd.f32 0.0, %v1929
      %v1931 = vpop.f32.mrb[0].mxu0
      %1932 = vmatprep.mubr.bf16.mxu0 0
      %1933 = vmatmul.mubr.bf16.gmra.mrb[0].mxu0 %v1111
      %v1934 = vpop.f32.mrb[0].mxu0
      %v1935 = vadd.f32 0.0, %v1934
      %v1936 = vpop.f32.mrb[0].mxu0
      %v1937 = vpop.f32.mrb[0].mxu0
      %v1938 = vadd.f32 0.0, %v1937
      %v1939 = vpop.f32.mrb[0].mxu0
      %1940 = vdwg.mxu0
      %v1941 = vpack.c.bf16 %v1882, %v1879
      %v1942 = vpack.c.bf16 %v1890, %v1887
      %v1943 = vpack.c.bf16 %v1898, %v1895
      %v1944 = vpack.c.bf16 %v1906, %v1903
      %v1945 = vpack.c.bf16 %v1914, %v1911
      %v1946 = vpack.c.bf16 %v1922, %v1919
      %v1947 = vpack.c.bf16 %v1930, %v1927
      %v1948 = vpack.c.bf16 %v1938, %v1935
      %1949 = vst [vmem:[#allocation2 + $0x8] sm:$0xff] %v1941
      %1950 = vst [vmem:[#allocation2 + $0x18] sm:$0xff] %v1942
      %1951 = vst [vmem:[#allocation2 + $0x28] sm:$0xff] %v1943
      %1952 = vst [vmem:[#allocation2 + $0x38] sm:$0xff] %v1944
      %1953 = vst [vmem:[#allocation2 + $0x48] sm:$0xff] %v1945
      %1954 = vst [vmem:[#allocation2 + $0x58] sm:$0xff] %v1946
      %1955 = vst [vmem:[#allocation2 + $0x68] sm:$0xff] %v1947
      %1956 = vst [vmem:[#allocation2 + $0x78] sm:$0xff] %v1948
      %v1957 = vld [vmem:[%s6] sm:$0xf]
      %v1958 = vld [vmem:[%s6 + $0x4] sm:$0xf]
      %v1959 = vld [vmem:[%s6 + $0x8] sm:$0xf]
      %v1960 = vld [vmem:[%s6 + $0xc] sm:$0xf]
      %v1961 = vld [vmem:[%s6 + $0x10] sm:$0xf]
      %v1962 = vld [vmem:[%s6 + $0x14] sm:$0xf]
      %v1963 = vld [vmem:[%s6 + $0x18] sm:$0xf]
      %v1964 = vld [vmem:[%s6 + $0x1c] sm:$0xf]
      %v1965 = vld [vmem:[%s6 + $0x20] sm:$0xf]
      %v1966 = vld [vmem:[%s6 + $0x24] sm:$0xf]
      %v1967 = vld [vmem:[%s6 + $0x28] sm:$0xf]
      %v1968 = vld [vmem:[%s6 + $0x2c] sm:$0xf]
      %v1969 = vld [vmem:[%s6 + $0x30] sm:$0xf]
      %v1970 = vld [vmem:[%s6 + $0x34] sm:$0xf]
      %v1971 = vld [vmem:[%s6 + $0x38] sm:$0xf]
      %v1972 = vld [vmem:[%s6 + $0x3c] sm:$0xf]
      %v1973 = vld [vmem:[%s6 + $0x40] sm:$0xf]
      %v1974 = vld [vmem:[%s6 + $0x44] sm:$0xf]
      %v1975 = vld [vmem:[%s6 + $0x48] sm:$0xf]
      %v1976 = vld [vmem:[%s6 + $0x4c] sm:$0xf]
      %v1977 = vld [vmem:[%s6 + $0x50] sm:$0xf]
      %v1978 = vld [vmem:[%s6 + $0x54] sm:$0xf]
      %v1979 = vld [vmem:[%s6 + $0x58] sm:$0xf]
      %v1980 = vld [vmem:[%s6 + $0x5c] sm:$0xf]
      %v1981 = vld [vmem:[%s6 + $0x60] sm:$0xf]
      %v1982 = vld [vmem:[%s6 + $0x64] sm:$0xf]
      %v1983 = vld [vmem:[%s6 + $0x68] sm:$0xf]
      %v1984 = vld [vmem:[%s6 + $0x6c] sm:$0xf]
      %v1985 = vld [vmem:[%s6 + $0x70] sm:$0xf]
      %v1986 = vld [vmem:[%s6 + $0x74] sm:$0xf]
      %v1987 = vld [vmem:[%s6 + $0x78] sm:$0xf]
      %v1988 = vld [vmem:[%s6 + $0x7c] sm:$0xf]
      %v1989 = vld [vmem:[#allocation2] sm:$0xff]
      %v1990 = vld [vmem:[#allocation2 + $0x8] sm:$0xff]
      %v1991 = vld [vmem:[#allocation2 + $0x10] sm:$0xff]
      %v1992 = vld [vmem:[#allocation2 + $0x18] sm:$0xff]
      %v1993 = vld [vmem:[#allocation2 + $0x20] sm:$0xff]
      %v1994 = vld [vmem:[#allocation2 + $0x28] sm:$0xff]
      %v1995 = vld [vmem:[#allocation2 + $0x30] sm:$0xff]
      %v1996 = vld [vmem:[#allocation2 + $0x38] sm:$0xff]
      %v1997 = vld [vmem:[#allocation2 + $0x40] sm:$0xff]
      %v1998 = vld [vmem:[#allocation2 + $0x48] sm:$0xff]
      %v1999 = vld [vmem:[#allocation2 + $0x50] sm:$0xff]
      %v2000 = vld [vmem:[#allocation2 + $0x58] sm:$0xff]
      %v2001 = vld [vmem:[#allocation2 + $0x60] sm:$0xff]
      %v2002 = vld [vmem:[#allocation2 + $0x68] sm:$0xff]
      %v2003 = vld [vmem:[#allocation2 + $0x70] sm:$0xff]
      %v2004 = vld [vmem:[#allocation2 + $0x78] sm:$0xff]
      %v2005 = vld [vmem:[%s7] sm:$0xff]
      %v2006 = vld [vmem:[%s7 + $0x8] sm:$0xff]
      %v2007 = vld [vmem:[%s7 + $0x10] sm:$0xff]
      %v2008 = vld [vmem:[%s7 + $0x18] sm:$0xff]
      %v2009 = vld [vmem:[%s7 + $0x20] sm:$0xff]
      %v2010 = vld [vmem:[%s7 + $0x28] sm:$0xff]
      %v2011 = vld [vmem:[%s7 + $0x30] sm:$0xff]
      %v2012 = vld [vmem:[%s7 + $0x38] sm:$0xff]
      %v2013 = vld [vmem:[%s7 + $0x40] sm:$0xff]
      %v2014 = vld [vmem:[%s7 + $0x48] sm:$0xff]
      %v2015 = vld [vmem:[%s7 + $0x50] sm:$0xff]
      %v2016 = vld [vmem:[%s7 + $0x58] sm:$0xff]
      %v2017 = vld [vmem:[%s7 + $0x60] sm:$0xff]
      %v2018 = vld [vmem:[%s7 + $0x68] sm:$0xff]
      %v2019 = vld [vmem:[%s7 + $0x70] sm:$0xff]
      %v2020 = vld [vmem:[%s7 + $0x78] sm:$0xff]
      %v2021 = vld [vmem:[%s7 + $0x80] sm:$0xff]
      %v2022 = vld [vmem:[%s7 + $0x88] sm:$0xff]
      %v2023 = vld [vmem:[%s7 + $0x90] sm:$0xff]
      %v2024 = vld [vmem:[%s7 + $0x98] sm:$0xff]
      %v2025 = vld [vmem:[%s7 + $0xa0] sm:$0xff]
      %v2026 = vld [vmem:[%s7 + $0xa8] sm:$0xff]
      %v2027 = vld [vmem:[%s7 + $0xb0] sm:$0xff]
      %v2028 = vld [vmem:[%s7 + $0xb8] sm:$0xff]
      %v2029 = vld [vmem:[%s7 + $0xc0] sm:$0xff]
      %v2030 = vld [vmem:[%s7 + $0xc8] sm:$0xff]
      %v2031 = vld [vmem:[%s7 + $0xd0] sm:$0xff]
      %v2032 = vld [vmem:[%s7 + $0xd8] sm:$0xff]
      %v2033 = vld [vmem:[%s7 + $0xe0] sm:$0xff]
      %v2034 = vld [vmem:[%s7 + $0xe8] sm:$0xff]
      %v2035 = vld [vmem:[%s7 + $0xf0] sm:$0xff]
      %v2036 = vld [vmem:[%s7 + $0xf8] sm:$0xff]
      %2038 = vset.pattern.permute.xlu0 0
      %2039 = vperm.xlu0 %2038, %v2005
      %v2040 = vpop.permute.xlu0 %2039
      %2043 = vset.pattern.permute.xlu0 0
      %2044 = vperm.xlu0 %2043, %v2006
      %v2045 = vpop.permute.xlu0 %2044
      %2048 = vset.pattern.permute.xlu0 0
      %2049 = vperm.xlu0 %2048, %v2007
      %v2050 = vpop.permute.xlu0 %2049
      %2053 = vset.pattern.permute.xlu0 0
      %2054 = vperm.xlu0 %2053, %v2008
      %v2055 = vpop.permute.xlu0 %2054
      %2058 = vset.pattern.permute.xlu0 0
      %2059 = vperm.xlu0 %2058, %v2009
      %v2060 = vpop.permute.xlu0 %2059
      %2063 = vset.pattern.permute.xlu0 0
      %2064 = vperm.xlu0 %2063, %v2010
      %v2065 = vpop.permute.xlu0 %2064
      %2068 = vset.pattern.permute.xlu0 0
      %2069 = vperm.xlu0 %2068, %v2011
      %v2070 = vpop.permute.xlu0 %2069
      %2073 = vset.pattern.permute.xlu0 0
      %2074 = vperm.xlu0 %2073, %v2012
      %v2075 = vpop.permute.xlu0 %2074
      %2078 = vset.pattern.permute.xlu0 0
      %2079 = vperm.xlu0 %2078, %v2013
      %v2080 = vpop.permute.xlu0 %2079
      %2083 = vset.pattern.permute.xlu0 0
      %2084 = vperm.xlu0 %2083, %v2014
      %v2085 = vpop.permute.xlu0 %2084
      %2088 = vset.pattern.permute.xlu0 0
      %2089 = vperm.xlu0 %2088, %v2015
      %v2090 = vpop.permute.xlu0 %2089
      %2093 = vset.pattern.permute.xlu0 0
      %2094 = vperm.xlu0 %2093, %v2016
      %v2095 = vpop.permute.xlu0 %2094
      %2098 = vset.pattern.permute.xlu0 0
      %2099 = vperm.xlu0 %2098, %v2017
      %v2100 = vpop.permute.xlu0 %2099
      %2103 = vset.pattern.permute.xlu0 0
      %2104 = vperm.xlu0 %2103, %v2018
      %v2105 = vpop.permute.xlu0 %2104
      %2108 = vset.pattern.permute.xlu0 0
      %2109 = vperm.xlu0 %2108, %v2019
      %v2110 = vpop.permute.xlu0 %2109
      %2113 = vset.pattern.permute.xlu0 0
      %2114 = vperm.xlu0 %2113, %v2020
      %v2115 = vpop.permute.xlu0 %2114
      %2118 = vset.pattern.permute.xlu0 0
      %2119 = vperm.xlu0 %2118, %v2021
      %v2120 = vpop.permute.xlu0 %2119
      %2123 = vset.pattern.permute.xlu0 0
      %2124 = vperm.xlu0 %2123, %v2022
      %v2125 = vpop.permute.xlu0 %2124
      %2128 = vset.pattern.permute.xlu0 0
      %2129 = vperm.xlu0 %2128, %v2023
      %v2130 = vpop.permute.xlu0 %2129
      %2133 = vset.pattern.permute.xlu0 0
      %2134 = vperm.xlu0 %2133, %v2024
      %v2135 = vpop.permute.xlu0 %2134
      %2138 = vset.pattern.permute.xlu0 0
      %2139 = vperm.xlu0 %2138, %v2025
      %v2140 = vpop.permute.xlu0 %2139
      %2143 = vset.pattern.permute.xlu0 0
      %2144 = vperm.xlu0 %2143, %v2026
      %v2145 = vpop.permute.xlu0 %2144
      %2148 = vset.pattern.permute.xlu0 0
      %2149 = vperm.xlu0 %2148, %v2027
      %v2150 = vpop.permute.xlu0 %2149
      %2153 = vset.pattern.permute.xlu0 0
      %2154 = vperm.xlu0 %2153, %v2028
      %v2155 = vpop.permute.xlu0 %2154
      %2158 = vset.pattern.permute.xlu0 0
      %2159 = vperm.xlu0 %2158, %v2029
      %v2160 = vpop.permute.xlu0 %2159
      %2163 = vset.pattern.permute.xlu0 0
      %2164 = vperm.xlu0 %2163, %v2030
      %v2165 = vpop.permute.xlu0 %2164
      %2168 = vset.pattern.permute.xlu0 0
      %2169 = vperm.xlu0 %2168, %v2031
      %v2170 = vpop.permute.xlu0 %2169
      %2173 = vset.pattern.permute.xlu0 0
      %2174 = vperm.xlu0 %2173, %v2032
      %v2175 = vpop.permute.xlu0 %2174
      %2178 = vset.pattern.permute.xlu0 0
      %2179 = vperm.xlu0 %2178, %v2033
      %v2180 = vpop.permute.xlu0 %2179
      %2183 = vset.pattern.permute.xlu0 0
      %2184 = vperm.xlu0 %2183, %v2034
      %v2185 = vpop.permute.xlu0 %2184
      %2188 = vset.pattern.permute.xlu0 0
      %2189 = vperm.xlu0 %2188, %v2035
      %v2190 = vpop.permute.xlu0 %2189
      %2193 = vset.pattern.permute.xlu0 0
      %2194 = vperm.xlu0 %2193, %v2036
      %v2195 = vpop.permute.xlu0 %2194
      %v2229 = vunpack.c.l.b16 %v1957
      %v2230 = vunpack.c.l.b16 %v1958
      %v2231 = vunpack.c.l.b16 %v1959
      %v2232 = vunpack.c.l.b16 %v1960
      %v2233 = vunpack.c.l.b16 %v1961
      %v2234 = vunpack.c.l.b16 %v1962
      %v2235 = vunpack.c.l.b16 %v1963
      %v2236 = vunpack.c.l.b16 %v1964
      %v2237 = vunpack.c.l.b16 %v1965
      %v2238 = vunpack.c.l.b16 %v1966
      %v2239 = vunpack.c.l.b16 %v1967
      %v2240 = vunpack.c.l.b16 %v1968
      %v2241 = vunpack.c.l.b16 %v1969
      %v2242 = vunpack.c.l.b16 %v1970
      %v2243 = vunpack.c.l.b16 %v1971
      %v2244 = vunpack.c.l.b16 %v1972
      %v2245 = vunpack.c.l.b16 %v1973
      %v2246 = vunpack.c.l.b16 %v1974
      %v2247 = vunpack.c.l.b16 %v1975
      %v2248 = vunpack.c.l.b16 %v1976
      %v2249 = vunpack.c.l.b16 %v1977
      %v2250 = vunpack.c.l.b16 %v1978
      %v2251 = vunpack.c.l.b16 %v1979
      %v2252 = vunpack.c.l.b16 %v1980
      %v2253 = vunpack.c.l.b16 %v1981
      %v2254 = vunpack.c.l.b16 %v1982
      %v2255 = vunpack.c.l.b16 %v1983
      %v2256 = vunpack.c.l.b16 %v1984
      %v2257 = vunpack.c.l.b16 %v1985
      %v2258 = vunpack.c.l.b16 %v1986
      %v2259 = vunpack.c.l.b16 %v1987
      %v2260 = vunpack.c.l.b16 %v1988
      %v2261 = vpack.c.b16 %v2230, %v2229
      %v2262 = vpack.c.b16 %v2232, %v2231
      %v2263 = vpack.c.b16 %v2234, %v2233
      %v2264 = vpack.c.b16 %v2236, %v2235
      %v2265 = vpack.c.b16 %v2238, %v2237
      %v2266 = vpack.c.b16 %v2240, %v2239
      %v2267 = vpack.c.b16 %v2242, %v2241
      %v2268 = vpack.c.b16 %v2244, %v2243
      %v2269 = vpack.c.b16 %v2246, %v2245
      %v2270 = vpack.c.b16 %v2248, %v2247
      %v2271 = vpack.c.b16 %v2250, %v2249
      %v2272 = vpack.c.b16 %v2252, %v2251
      %v2273 = vpack.c.b16 %v2254, %v2253
      %v2274 = vpack.c.b16 %v2256, %v2255
      %v2275 = vpack.c.b16 %v2258, %v2257
      %v2276 = vpack.c.b16 %v2260, %v2259
      %2293 = vmatprep.subr.bf16.mxu0 %v1990
      %2294 = vmatpush1.bf16.msra.mxu0 %v1989
      %2295 = vmatprep.subr.bf16.mxu0 %v1992
      %2296 = vmatpush1.bf16.msra.mxu0 %v1991
      %2297 = vmatprep.subr.bf16.mxu0 %v1994
      %2298 = vmatpush1.bf16.msra.mxu0 %v1993
      %2299 = vmatprep.subr.bf16.mxu0 %v1996
      %2300 = vmatpush1.bf16.msra.mxu0 %v1995
      %2301 = vmatprep.subr.bf16.mxu0 %v1998
      %2302 = vmatpush1.bf16.msra.mxu0 %v1997
      %2303 = vmatprep.subr.bf16.mxu0 %v2000
      %2304 = vmatpush1.bf16.msra.mxu0 %v1999
      %2305 = vmatprep.subr.bf16.mxu0 %v2002
      %2306 = vmatpush1.bf16.msra.mxu0 %v2001
      %2307 = vmatprep.subr.bf16.mxu0 %v2004
      %2308 = vmatpush1.bf16.msra.mxu0 %v2003
      %2309 = vmatprep.subr.bf16.mxu0 0
      %2310 = vmatpush1.bf16.msra.mxu0 0
      %2311 = vmatprep.subr.bf16.mxu0 0
      %2312 = vmatpush1.bf16.msra.mxu0 0
      %2313 = vmatprep.subr.bf16.mxu0 0
      %2314 = vmatpush1.bf16.msra.mxu0 0
      %2315 = vmatprep.subr.bf16.mxu0 0
      %2316 = vmatpush1.bf16.msra.mxu0 0
      %2317 = vmatprep.subr.bf16.mxu0 0
      %2318 = vmatpush1.bf16.msra.mxu0 0
      %2319 = vmatprep.subr.bf16.mxu0 0
      %2320 = vmatpush1.bf16.msra.mxu0 0
      %2321 = vmatprep.subr.bf16.mxu0 0
      %2322 = vmatpush1.bf16.msra.mxu0 0
      %2323 = vmatprep.subr.bf16.mxu0 0
      %2324 = vmatpush1.bf16.msra.mxu0 0
      %2325 = vmatprep.mubr.bf16.mxu0 0
      %2326 = vmatmul.mubr.bf16.gmra.mrb[0].mxu0 %v2261
      %v2327 = vpop.f32.mrb[0].mxu0
      %v2328 = vadd.f32 %v2040, %v2327
      %v2329 = vpop.f32.mrb[0].mxu0
      %v2330 = vadd.f32 %v2040, %v2329
      %v2331 = vpop.f32.mrb[0].mxu0
      %v2332 = vadd.f32 %v2045, %v2331
      %v2333 = vpop.f32.mrb[0].mxu0
      %v2334 = vadd.f32 %v2045, %v2333
      %2335 = vmatprep.mubr.bf16.mxu0 0
      %2336 = vmatmul.mubr.bf16.gmra.mrb[0].mxu0 %v2262
      %v2337 = vpop.f32.mrb[0].mxu0
      %v2338 = vadd.f32 %v2050, %v2337
      %v2339 = vpop.f32.mrb[0].mxu0
      %v2340 = vadd.f32 %v2050, %v2339
      %v2341 = vpop.f32.mrb[0].mxu0
      %v2342 = vadd.f32 %v2055, %v2341
      %v2343 = vpop.f32.mrb[0].mxu0
      %v2344 = vadd.f32 %v2055, %v2343
      %2345 = vmatprep.mubr.bf16.mxu0 0
      %2346 = vmatmul.mubr.bf16.gmra.mrb[0].mxu0 %v2263
      %v2347 = vpop.f32.mrb[0].mxu0
      %v2348 = vadd.f32 %v2060, %v2347
      %v2349 = vpop.f32.mrb[0].mxu0
      %v2350 = vadd.f32 %v2060, %v2349
      %v2351 = vpop.f32.mrb[0].mxu0
      %v2352 = vadd.f32 %v2065, %v2351
      %v2353 = vpop.f32.mrb[0].mxu0
      %v2354 = vadd.f32 %v2065, %v2353
      %2355 = vmatprep.mubr.bf16.mxu0 0
      %2356 = vmatmul.mubr.bf16.gmra.mrb[0].mxu0 %v2264
      %v2357 = vpop.f32.mrb[0].mxu0
      %v2358 = vadd.f32 %v2070, %v2357
      %v2359 = vpop.f32.mrb[0].mxu0
      %v2360 = vadd.f32 %v2070, %v2359
      %v2361 = vpop.f32.mrb[0].mxu0
      %v2362 = vadd.f32 %v2075, %v2361
      %v2363 = vpop.f32.mrb[0].mxu0
      %v2364 = vadd.f32 %v2075, %v2363
      %2365 = vmatprep.mubr.bf16.mxu0 0
      %2366 = vmatmul.mubr.bf16.gmra.mrb[0].mxu0 %v2265
      %v2367 = vpop.f32.mrb[0].mxu0
      %v2368 = vadd.f32 %v2080, %v2367
      %v2369 = vpop.f32.mrb[0].mxu0
      %v2370 = vadd.f32 %v2080, %v2369
      %v2371 = vpop.f32.mrb[0].mxu0
      %v2372 = vadd.f32 %v2085, %v2371
      %v2373 = vpop.f32.mrb[0].mxu0
      %v2374 = vadd.f32 %v2085, %v2373
      %2375 = vmatprep.mubr.bf16.mxu0 0
      %2376 = vmatmul.mubr.bf16.gmra.mrb[0].mxu0 %v2266
      %v2377 = vpop.f32.mrb[0].mxu0
      %v2378 = vadd.f32 %v2090, %v2377
      %v2379 = vpop.f32.mrb[0].mxu0
      %v2380 = vadd.f32 %v2090, %v2379
      %v2381 = vpop.f32.mrb[0].mxu0
      %v2382 = vadd.f32 %v2095, %v2381
      %v2383 = vpop.f32.mrb[0].mxu0
      %v2384 = vadd.f32 %v2095, %v2383
      %2385 = vmatprep.mubr.bf16.mxu0 0
      %2386 = vmatmul.mubr.bf16.gmra.mrb[0].mxu0 %v2267
      %v2387 = vpop.f32.mrb[0].mxu0
      %v2388 = vadd.f32 %v2100, %v2387
      %v2389 = vpop.f32.mrb[0].mxu0
      %v2390 = vadd.f32 %v2100, %v2389
      %v2391 = vpop.f32.mrb[0].mxu0
      %v2392 = vadd.f32 %v2105, %v2391
      %v2393 = vpop.f32.mrb[0].mxu0
      %v2394 = vadd.f32 %v2105, %v2393
      %2395 = vmatprep.mubr.bf16.mxu0 0
      %2396 = vmatmul.mubr.bf16.gmra.mrb[0].mxu0 %v2268
      %v2397 = vpop.f32.mrb[0].mxu0
      %v2398 = vadd.f32 %v2110, %v2397
      %v2399 = vpop.f32.mrb[0].mxu0
      %v2400 = vadd.f32 %v2110, %v2399
      %v2401 = vpop.f32.mrb[0].mxu0
      %v2402 = vadd.f32 %v2115, %v2401
      %v2403 = vpop.f32.mrb[0].mxu0
      %v2404 = vadd.f32 %v2115, %v2403
      %2405 = vmatprep.mubr.bf16.mxu0 0
      %2406 = vmatmul.mubr.bf16.gmra.mrb[0].mxu0 %v2269
      %v2407 = vpop.f32.mrb[0].mxu0
      %v2408 = vadd.f32 %v2120, %v2407
      %v2409 = vpop.f32.mrb[0].mxu0
      %v2410 = vadd.f32 %v2120, %v2409
      %v2411 = vpop.f32.mrb[0].mxu0
      %v2412 = vadd.f32 %v2125, %v2411
      %v2413 = vpop.f32.mrb[0].mxu0
      %v2414 = vadd.f32 %v2125, %v2413
      %2415 = vmatprep.mubr.bf16.mxu0 0
      %2416 = vmatmul.mubr.bf16.gmra.mrb[0].mxu0 %v2270
      %v2417 = vpop.f32.mrb[0].mxu0
      %v2418 = vadd.f32 %v2130, %v2417
      %v2419 = vpop.f32.mrb[0].mxu0
      %v2420 = vadd.f32 %v2130, %v2419
      %v2421 = vpop.f32.mrb[0].mxu0
      %v2422 = vadd.f32 %v2135, %v2421
      %v2423 = vpop.f32.mrb[0].mxu0
      %v2424 = vadd.f32 %v2135, %v2423
      %2425 = vmatprep.mubr.bf16.mxu0 0
      %2426 = vmatmul.mubr.bf16.gmra.mrb[0].mxu0 %v2271
      %v2427 = vpop.f32.mrb[0].mxu0
      %v2428 = vadd.f32 %v2140, %v2427
      %v2429 = vpop.f32.mrb[0].mxu0
      %v2430 = vadd.f32 %v2140, %v2429
      %v2431 = vpop.f32.mrb[0].mxu0
      %v2432 = vadd.f32 %v2145, %v2431
      %v2433 = vpop.f32.mrb[0].mxu0
      %v2434 = vadd.f32 %v2145, %v2433
      %2435 = vmatprep.mubr.bf16.mxu0 0
      %2436 = vmatmul.mubr.bf16.gmra.mrb[0].mxu0 %v2272
      %v2437 = vpop.f32.mrb[0].mxu0
      %v2438 = vadd.f32 %v2150, %v2437
      %v2439 = vpop.f32.mrb[0].mxu0
      %v2440 = vadd.f32 %v2150, %v2439
      %v2441 = vpop.f32.mrb[0].mxu0
      %v2442 = vadd.f32 %v2155, %v2441
      %v2443 = vpop.f32.mrb[0].mxu0
      %v2444 = vadd.f32 %v2155, %v2443
      %2445 = vmatprep.mubr.bf16.mxu0 0
      %2446 = vmatmul.mubr.bf16.gmra.mrb[0].mxu0 %v2273
      %v2447 = vpop.f32.mrb[0].mxu0
      %v2448 = vadd.f32 %v2160, %v2447
      %v2449 = vpop.f32.mrb[0].mxu0
      %v2450 = vadd.f32 %v2160, %v2449
      %v2451 = vpop.f32.mrb[0].mxu0
      %v2452 = vadd.f32 %v2165, %v2451
      %v2453 = vpop.f32.mrb[0].mxu0
      %v2454 = vadd.f32 %v2165, %v2453
      %2455 = vmatprep.mubr.bf16.mxu0 0
      %2456 = vmatmul.mubr.bf16.gmra.mrb[0].mxu0 %v2274
      %v2457 = vpop.f32.mrb[0].mxu0
      %v2458 = vadd.f32 %v2170, %v2457
      %v2459 = vpop.f32.mrb[0].mxu0
      %v2460 = vadd.f32 %v2170, %v2459
      %v2461 = vpop.f32.mrb[0].mxu0
      %v2462 = vadd.f32 %v2175, %v2461
      %v2463 = vpop.f32.mrb[0].mxu0
      %v2464 = vadd.f32 %v2175, %v2463
      %2465 = vmatprep.mubr.bf16.mxu0 0
      %2466 = vmatmul.mubr.bf16.gmra.mrb[0].mxu0 %v2275
      %v2467 = vpop.f32.mrb[0].mxu0
      %v2468 = vadd.f32 %v2180, %v2467
      %v2469 = vpop.f32.mrb[0].mxu0
      %v2470 = vadd.f32 %v2180, %v2469
      %v2471 = vpop.f32.mrb[0].mxu0
      %v2472 = vadd.f32 %v2185, %v2471
      %v2473 = vpop.f32.mrb[0].mxu0
      %v2474 = vadd.f32 %v2185, %v2473
      %2475 = vmatprep.mubr.bf16.mxu0 0
      %2476 = vmatmul.mubr.bf16.gmra.mrb[0].mxu0 %v2276
      %v2477 = vpop.f32.mrb[0].mxu0
      %v2478 = vadd.f32 %v2190, %v2477
      %v2479 = vpop.f32.mrb[0].mxu0
      %v2480 = vadd.f32 %v2190, %v2479
      %v2481 = vpop.f32.mrb[0].mxu0
      %v2482 = vadd.f32 %v2195, %v2481
      %v2483 = vpop.f32.mrb[0].mxu0
      %v2484 = vadd.f32 %v2195, %v2483
      %2485 = vdwg.mxu0
      %v2486 = vadd.f32 %v2328, %v327
      %v2487 = vadd.f32 %v2330, %v328
      %v2488 = vadd.f32 %v2332, %v329
      %v2489 = vadd.f32 %v2334, %v330
      %v2490 = vadd.f32 %v2338, %v331
      %v2491 = vadd.f32 %v2340, %v332
      %v2492 = vadd.f32 %v2342, %v333
      %v2493 = vadd.f32 %v2344, %v334
      %v2494 = vadd.f32 %v2348, %v335
      %v2495 = vadd.f32 %v2350, %v336
      %v2496 = vadd.f32 %v2352, %v337
      %v2497 = vadd.f32 %v2354, %v338
      %v2498 = vadd.f32 %v2358, %v339
      %v2499 = vadd.f32 %v2360, %v340
      %v2500 = vadd.f32 %v2362, %v341
      %v2501 = vadd.f32 %v2364, %v342
      %v2502 = vadd.f32 %v2368, %v343
      %v2503 = vadd.f32 %v2370, %v344
      %v2504 = vadd.f32 %v2372, %v345
      %v2505 = vadd.f32 %v2374, %v346
      %v2506 = vadd.f32 %v2378, %v347
      %v2507 = vadd.f32 %v2380, %v348
      %v2508 = vadd.f32 %v2382, %v349
      %v2509 = vadd.f32 %v2384, %v350
      %v2510 = vadd.f32 %v2388, %v351
      %v2511 = vadd.f32 %v2390, %v352
      %v2512 = vadd.f32 %v2392, %v353
      %v2513 = vadd.f32 %v2394, %v354
      %v2514 = vadd.f32 %v2398, %v355
      %v2515 = vadd.f32 %v2400, %v356
      %v2516 = vadd.f32 %v2402, %v357
      %v2517 = vadd.f32 %v2404, %v358
      %v2518 = vadd.f32 %v2408, %v359
      %v2519 = vadd.f32 %v2410, %v360
      %v2520 = vadd.f32 %v2412, %v361
      %v2521 = vadd.f32 %v2414, %v362
      %v2522 = vadd.f32 %v2418, %v363
      %v2523 = vadd.f32 %v2420, %v364
      %v2524 = vadd.f32 %v2422, %v365
      %v2525 = vadd.f32 %v2424, %v366
      %v2526 = vadd.f32 %v2428, %v367
      %v2527 = vadd.f32 %v2430, %v368
      %v2528 = vadd.f32 %v2432, %v369
      %v2529 = vadd.f32 %v2434, %v370
      %v2530 = vadd.f32 %v2438, %v371
      %v2531 = vadd.f32 %v2440, %v372
      %v2532 = vadd.f32 %v2442, %v373
      %v2533 = vadd.f32 %v2444, %v374
      %v2534 = vadd.f32 %v2448, %v375
      %v2535 = vadd.f32 %v2450, %v376
      %v2536 = vadd.f32 %v2452, %v377
      %v2537 = vadd.f32 %v2454, %v378
      %v2538 = vadd.f32 %v2458, %v379
      %v2539 = vadd.f32 %v2460, %v380
      %v2540 = vadd.f32 %v2462, %v381
      %v2541 = vadd.f32 %v2464, %v382
      %v2542 = vadd.f32 %v2468, %v383
      %v2543 = vadd.f32 %v2470, %v384
      %v2544 = vadd.f32 %v2472, %v385
      %v2545 = vadd.f32 %v2474, %v386
      %v2546 = vadd.f32 %v2478, %v387
      %v2547 = vadd.f32 %v2480, %v388
      %v2548 = vadd.f32 %v2482, %v389
      %v2549 = vadd.f32 %v2484, %v390
      %2550 = vst [vmem:[%s325] sm:$0xff] %v2486
      %2551 = vst [vmem:[%s325 + $0x8] sm:$0xff] %v2487
      %2552 = vst [vmem:[%s325 + $0x10] sm:$0xff] %v2488
      %2553 = vst [vmem:[%s325 + $0x18] sm:$0xff] %v2489
      %2554 = vst [vmem:[%s325 + $0x20] sm:$0xff] %v2490
      %2555 = vst [vmem:[%s325 + $0x28] sm:$0xff] %v2491
      %2556 = vst [vmem:[%s325 + $0x30] sm:$0xff] %v2492
      %2557 = vst [vmem:[%s325 + $0x38] sm:$0xff] %v2493
      %2558 = vst [vmem:[%s325 + $0x40] sm:$0xff] %v2494
      %2559 = vst [vmem:[%s325 + $0x48] sm:$0xff] %v2495
      %2560 = vst [vmem:[%s325 + $0x50] sm:$0xff] %v2496
      %2561 = vst [vmem:[%s325 + $0x58] sm:$0xff] %v2497
      %2562 = vst [vmem:[%s325 + $0x60] sm:$0xff] %v2498
      %2563 = vst [vmem:[%s325 + $0x68] sm:$0xff] %v2499
      %2564 = vst [vmem:[%s325 + $0x70] sm:$0xff] %v2500
      %2565 = vst [vmem:[%s325 + $0x78] sm:$0xff] %v2501
      %2566 = vst [vmem:[%s325 + $0x80] sm:$0xff] %v2502
      %2567 = vst [vmem:[%s325 + $0x88] sm:$0xff] %v2503
      %2568 = vst [vmem:[%s325 + $0x90] sm:$0xff] %v2504
      %2569 = vst [vmem:[%s325 + $0x98] sm:$0xff] %v2505
      %2570 = vst [vmem:[%s325 + $0xa0] sm:$0xff] %v2506
      %2571 = vst [vmem:[%s325 + $0xa8] sm:$0xff] %v2507
      %2572 = vst [vmem:[%s325 + $0xb0] sm:$0xff] %v2508
      %2573 = vst [vmem:[%s325 + $0xb8] sm:$0xff] %v2509
      %2574 = vst [vmem:[%s325 + $0xc0] sm:$0xff] %v2510
      %2575 = vst [vmem:[%s325 + $0xc8] sm:$0xff] %v2511
      %2576 = vst [vmem:[%s325 + $0xd0] sm:$0xff] %v2512
      %2577 = vst [vmem:[%s325 + $0xd8] sm:$0xff] %v2513
      %2578 = vst [vmem:[%s325 + $0xe0] sm:$0xff] %v2514
      %2579 = vst [vmem:[%s325 + $0xe8] sm:$0xff] %v2515
      %2580 = vst [vmem:[%s325 + $0xf0] sm:$0xff] %v2516
      %2581 = vst [vmem:[%s325 + $0xf8] sm:$0xff] %v2517
      %2582 = vst [vmem:[%s325 + $0x100] sm:$0xff] %v2518
      %2583 = vst [vmem:[%s325 + $0x108] sm:$0xff] %v2519
      %2584 = vst [vmem:[%s325 + $0x110] sm:$0xff] %v2520
      %2585 = vst [vmem:[%s325 + $0x118] sm:$0xff] %v2521
      %2586 = vst [vmem:[%s325 + $0x120] sm:$0xff] %v2522
      %2587 = vst [vmem:[%s325 + $0x128] sm:$0xff] %v2523
      %2588 = vst [vmem:[%s325 + $0x130] sm:$0xff] %v2524
      %2589 = vst [vmem:[%s325 + $0x138] sm:$0xff] %v2525
      %2590 = vst [vmem:[%s325 + $0x140] sm:$0xff] %v2526
      %2591 = vst [vmem:[%s325 + $0x148] sm:$0xff] %v2527
      %2592 = vst [vmem:[%s325 + $0x150] sm:$0xff] %v2528
      %2593 = vst [vmem:[%s325 + $0x158] sm:$0xff] %v2529
      %2594 = vst [vmem:[%s325 + $0x160] sm:$0xff] %v2530
      %2595 = vst [vmem:[%s325 + $0x168] sm:$0xff] %v2531
      %2596 = vst [vmem:[%s325 + $0x170] sm:$0xff] %v2532
      %2597 = vst [vmem:[%s325 + $0x178] sm:$0xff] %v2533
      %2598 = vst [vmem:[%s325 + $0x180] sm:$0xff] %v2534
      %2599 = vst [vmem:[%s325 + $0x188] sm:$0xff] %v2535
      %2600 = vst [vmem:[%s325 + $0x190] sm:$0xff] %v2536
      %2601 = vst [vmem:[%s325 + $0x198] sm:$0xff] %v2537
      %2602 = vst [vmem:[%s325 + $0x1a0] sm:$0xff] %v2538
      %2603 = vst [vmem:[%s325 + $0x1a8] sm:$0xff] %v2539
      %2604 = vst [vmem:[%s325 + $0x1b0] sm:$0xff] %v2540
      %2605 = vst [vmem:[%s325 + $0x1b8] sm:$0xff] %v2541
      %2606 = vst [vmem:[%s325 + $0x1c0] sm:$0xff] %v2542
      %2607 = vst [vmem:[%s325 + $0x1c8] sm:$0xff] %v2543
      %2608 = vst [vmem:[%s325 + $0x1d0] sm:$0xff] %v2544
      %2609 = vst [vmem:[%s325 + $0x1d8] sm:$0xff] %v2545
      %2610 = vst [vmem:[%s325 + $0x1e0] sm:$0xff] %v2546
      %2611 = vst [vmem:[%s325 + $0x1e8] sm:$0xff] %v2547
      %2612 = vst [vmem:[%s325 + $0x1f0] sm:$0xff] %v2548
      %2613 = vst [vmem:[%s325 + $0x1f8] sm:$0xff] %v2549
      %p2614 = scmp.lt.s32.totalorder %s19, 1
      %s2615 = scalar_select %p2614, %s19, 1
      %s2616 = smul.addr %s2615, 64
      %s2617 = smul.addr %s2616, 8
      %s2618 = scalar_lea.vmem %s8, %s2617
      // Predicated region
      $region53: #{pnl_forward.1} parent=51 // pred_check
        %p2619 = pneg %p215
      $region54: #{pnl_forward.1} parent=51 // pred_check_branch
        %2621 = sbr.rel (%p2619) target = $region56
      $region55: #{pnl_forward.1} parent=51 // pred_region
        _
      $region56: #{pnl_forward.1} parent=51 // pred_fallthru
        _
    $region52: #{pnl_forward.1} parent=5 // pred_fallthru
      _
    %p2622 = scmp.le.s32.totalorder 2, %s14
    // Predicated region
    $region57: #{pnl_forward.1} parent=5 // pred_check
      %p2623 = pneg %p2622
    $region58: #{pnl_forward.1} parent=5 // pred_check_branch
      %2625 = sbr.rel (%p2623) target = $region60
    $region59: #{pnl_forward.1} parent=5 // pred_region
      %s2626 = ssub.s32 %s14, 2
      // Predicated region
      $region61: #{pnl_forward.1} parent=59 // pred_check
        %p2627 = pneg %p221
      $region62: #{pnl_forward.1} parent=59 // pred_check_branch
        %2629 = sbr.rel (%p2627) target = $region64
      $region63: #{pnl_forward.1} parent=59 // pred_region
        %p2630 = scmp.lt.s32.totalorder %s20, 1
        %s2631 = scalar_select %p2630, %s20, 1
        %s2632 = smul.addr %s2631, 64
        %s2633 = smul.addr %s2632, 8
        %s2634 = scalar_lea.vmem %s8, %s2633
      $region64: #{pnl_forward.1} parent=59 // pred_fallthru
        _
    $region60: #{pnl_forward.1} parent=5 // pred_fallthru
      _
  $region6: #{pnl_forward.1} parent=0 // loop_footer
    %s18 = sadd.s32 1, %s14
  $region7: #{pnl_forward.1} parent=0 // loop_footer_branch
    %13 = sbr.rel target = $region3
  $region8: #{pnl_forward.1} parent=0 // loop_exit
    _

</llo_original>
